<compile_context>
chip_gen: v7x
topology: tpu7x:2x2x1
jax: 0.10.0
libtpu: 0.0.40
codegen_flags: <defaults>
</compile_context>

<pallas_src>
import functools
import math

import jax
import jax.numpy as jnp
from jax import lax
from jax.experimental import pallas as pl
from jax.experimental.pallas import tpu as pltpu


# y = x @ W^T : contract dim 1 of LHS with dim 1 of RHS — the MXU consumes the
# transposed operand natively, so no transpose copy of W (or K) is materialized.
_DN_TRANS_B = (((1,), (1,)), ((), ()))
_DN_PLAIN = (((1,), (0,)), ((), ()))


def _pick_tq(tgt_len):
    """Row-tile for the tgt_len axis (bounds the (1,H,tq,S) output block)."""
    if tgt_len <= 128:
        return tgt_len
    for cand in (128, 64, 32, 16, 8):
        if tgt_len % cand == 0:
            return cand
    return tgt_len


def _pick_vmem_limit():
    """Generation-aware VMEM budget: ~3/4 of physical, capped at 100 MiB."""
    try:
        cap = pltpu.get_tpu_info().vmem_capacity_bytes
        return int(min(100 * 1024 * 1024, (cap * 3) // 4))
    except Exception:
        return 64 * 1024 * 1024


# ----------------------------------------------------------------------------
# Single fused kernel: per-(batch, tgt-tile) block.
# ----------------------------------------------------------------------------
def _fused_mha_kernel(q_ref, k_ref, v_ref, m_ref,
                      wq_ref, wk_ref, wv_ref, bq_ref, bk_ref, bv_ref,
                      wo_ref, bo_ref,
                      o_ref, w_ref, avg_ref, *, num_heads, head_dim):
    xq = q_ref[0]                 # (tq, E)  raw query rows for this block
    xk = k_ref[0]                 # (S,  E)  raw key rows (whole src_len)
    xv = v_ref[0]                 # (S,  E)  raw value rows
    m = m_ref[0]                  # (tq, S)  proposal mask

    # Fused in-projection: one full-width GEMM per projection per grid step.
    # 1/sqrt(head_dim) scaling is already folded into wq/bq at trace time.
    q = (lax.dot_general(xq, wq_ref[...], _DN_TRANS_B,
                         preferred_element_type=jnp.float32) + bq_ref[...])
    k = (lax.dot_general(xk, wk_ref[...], _DN_TRANS_B,
                         preferred_element_type=jnp.float32) + bk_ref[...])
    v = (lax.dot_general(xv, wv_ref[...], _DN_TRANS_B,
                         preferred_element_type=jnp.float32) + bv_ref[...])

    wo = wo_ref[...]              # (E, E), resident across the whole grid

    o_acc = None
    avg_acc = None
    for h in range(num_heads):    # num_heads is small and static -> unrolled
        lo = h * head_dim
        hi = lo + head_dim
        qh = q[:, lo:hi]          # (tq, D)
        kh = k[:, lo:hi]          # (S,  D)
        vh = v[:, lo:hi]          # (S,  D)

        s = lax.dot_general(qh, kh, _DN_TRANS_B,
                            preferred_element_type=jnp.float32)        # (tq, S)
        s = s - jnp.max(s, axis=-1, keepdims=True)
        p = jnp.exp(s)
        inv_l = pl.reciprocal(jnp.sum(p, axis=-1, keepdims=True), approx=True)
        # NOTE: per the reference module, the proposal mask multiplies the
        # softmax probabilities WITHOUT renormalization; the softmax
        # normalization and the mask multiply are fused into one pass.
        wgt = p * (m * inv_l)                                           # (tq, S)

        w_ref[0, h] = wgt.astype(w_ref.dtype)
        avg_acc = wgt if avg_acc is None else avg_acc + wgt

        ho = lax.dot_general(wgt, vh, _DN_PLAIN,
                             preferred_element_type=jnp.float32)        # (tq, D)
        # Output projection accumulated per head (no head concat):
        #   out = sum_h  head_out_h @ Wo[:, h*D:(h+1)*D]^T
        contrib = lax.dot_general(ho, wo[:, lo:hi], _DN_TRANS_B,
                                  preferred_element_type=jnp.float32)   # (tq, E)
        o_acc = contrib if o_acc is None else o_acc + contrib

    # avg-over-heads computed in-kernel (no extra XLA pass over (B,H,T,S)).
    avg_ref[0] = (avg_acc * (1.0 / num_heads)).astype(avg_ref.dtype)
    o_ref[0] = (o_acc + bo_ref[...]).astype(o_ref.dtype)


# ----------------------------------------------------------------------------
# Full forward pass (outDecoderLayer=False, bias=True, dropout=0.0,
# need_weights=True, no key_padding_mask / attn_mask — the reference path).
# ----------------------------------------------------------------------------
def multi_head_attention_my(query, key, value, proposal_mask, params, num_heads):
    tgt_len, bsz, embed_dim = query.shape
    src_len = key.shape[0]
    E = embed_dim
    head_dim = E // num_heads
    scaling = float(head_dim) ** -0.5

    w_in = params["in_proj_weight"]       # (3E, E)
    b_in = params["in_proj_bias"]         # (3E,)
    w_out = params["out_proj_weight"].astype(jnp.float32)   # (E, E)
    b_out = params["out_proj_bias"]       # (E,)

    # Fold the 1/sqrt(head_dim) scaling into the q projection weights/bias
    # (module applies the scale after the bias add -> scale both).
    w_q = (w_in[:E] * scaling).astype(jnp.float32)
    b_q = (b_in[:E] * scaling).reshape(1, E).astype(jnp.float32)
    w_k = w_in[E:2 * E].astype(jnp.float32)
    b_k = b_in[E:2 * E].reshape(1, E).astype(jnp.float32)
    w_v = w_in[2 * E:].astype(jnp.float32)
    b_v = b_in[2 * E:].reshape(1, E).astype(jnp.float32)
    b_o = b_out.reshape(1, E).astype(jnp.float32)

    # Single cheap HBM relayout of the RAW inputs to batch-major; the projected
    # activations never touch HBM.
    q_bte = jnp.transpose(query, (1, 0, 2)).astype(jnp.float32)   # (B, T, E)
    k_bse = jnp.transpose(key, (1, 0, 2)).astype(jnp.float32)     # (B, S, E)
    v_bse = jnp.transpose(value, (1, 0, 2)).astype(jnp.float32)   # (B, S, E)
    mask = proposal_mask.reshape(bsz, tgt_len, -1).astype(jnp.float32)

    tq = _pick_tq(tgt_len)
    n_tq = tgt_len // tq
    vmem_limit = _pick_vmem_limit()

    flops = 2 * bsz * ((tgt_len + 2 * src_len) * E * E          # in-projections
                       + 2 * tgt_len * src_len * E              # QK^T + P.V
                       + tgt_len * E * E)                       # out-projection
    transcendentals = bsz * num_heads * tgt_len * (src_len + 1)  # exp + rcp
    bytes_accessed = 4 * (bsz * (tgt_len + 2 * src_len) * E      # raw acts in
                          + bsz * tgt_len * src_len               # mask in
                          + 4 * E * E + 4 * E                     # params
                          + bsz * tgt_len * E                     # out
                          + bsz * num_heads * tgt_len * src_len   # weights out
                          + bsz * tgt_len * src_len)              # avg out

    kernel = functools.partial(_fused_mha_kernel, num_heads=num_heads,
                               head_dim=head_dim)

    out_bte, weights_bhts, avg_bts = pl.pallas_call(
        kernel,
        grid=(bsz, n_tq),
        in_specs=[
            pl.BlockSpec((1, tq, E), lambda b, t: (b, t, 0)),          # query rows
            pl.BlockSpec((1, src_len, E), lambda b, t: (b, 0, 0)),     # key rows
            pl.BlockSpec((1, src_len, E), lambda b, t: (b, 0, 0)),     # value rows
            pl.BlockSpec((1, tq, src_len), lambda b, t: (b, t, 0)),    # mask
            pl.BlockSpec((E, E), lambda b, t: (0, 0)),                 # Wq (resident)
            pl.BlockSpec((E, E), lambda b, t: (0, 0)),                 # Wk
            pl.BlockSpec((E, E), lambda b, t: (0, 0)),                 # Wv
            pl.BlockSpec((1, E), lambda b, t: (0, 0)),                 # bq
            pl.BlockSpec((1, E), lambda b, t: (0, 0)),                 # bk
            pl.BlockSpec((1, E), lambda b, t: (0, 0)),                 # bv
            pl.BlockSpec((E, E), lambda b, t: (0, 0)),                 # Wo
            pl.BlockSpec((1, E), lambda b, t: (0, 0)),                 # bo
        ],
        out_specs=[
            pl.BlockSpec((1, tq, E), lambda b, t: (b, t, 0)),
            pl.BlockSpec((1, num_heads, tq, src_len), lambda b, t: (b, 0, t, 0)),
            pl.BlockSpec((1, tq, src_len), lambda b, t: (b, t, 0)),
        ],
        out_shape=[
            jax.ShapeDtypeStruct((bsz, tgt_len, E), jnp.float32),
            jax.ShapeDtypeStruct((bsz, num_heads, tgt_len, src_len), jnp.float32),
            jax.ShapeDtypeStruct((bsz, tgt_len, src_len), jnp.float32),
        ],
        compiler_params=pltpu.CompilerParams(
            dimension_semantics=("parallel", "parallel"),
            vmem_limit_bytes=vmem_limit,
        ),
        cost_estimate=pl.CostEstimate(
            flops=int(flops),
            transcendentals=int(transcendentals),
            bytes_accessed=int(bytes_accessed)),
    )(q_bte, k_bse, v_bse, mask, w_q, w_k, w_v, b_q, b_k, b_v, w_out, b_o)

    # (B, T, E) -> (T, B, E): single small layout fix for the module's return
    # convention; all heavy intermediates stayed inside the kernel.
    attn_output = out_bte.transpose(1, 0, 2)

    # TODO(synk): dropout_p=0.0 in this config, so F.dropout is the identity.
    return attn_output, [avg_bts, attn_output], weights_bhts


# ----------------------------------------------------------------------------
# Pure-JAX reference (for verification)
# ----------------------------------------------------------------------------
def reference_forward(query, key, value, proposal_mask, params, num_heads):
    tgt_len, bsz, embed_dim = query.shape
    src_len = key.shape[0]
    head_dim = embed_dim // num_heads
    scaling = float(head_dim) ** -0.5
    w_in, b_in = params["in_proj_weight"], params["in_proj_bias"]
    q = query @ w_in[:embed_dim].T + b_in[:embed_dim]
    k = key @ w_in[embed_dim:2 * embed_dim].T + b_in[embed_dim:2 * embed_dim]
    v = value @ w_in[2 * embed_dim:].T + b_in[2 * embed_dim:]
    q = (q * scaling).reshape(tgt_len, bsz * num_heads, head_dim).transpose(1, 0, 2)
    k = k.reshape(src_len, bsz * num_heads, head_dim).transpose(1, 0, 2)
    v = v.reshape(src_len, bsz * num_heads, head_dim).transpose(1, 0, 2)
    s = jnp.einsum("btd,bsd->bts", q, k)
    p = jax.nn.softmax(s, axis=-1)
    mask = proposal_mask.reshape(bsz, tgt_len, -1)
    mask_nhead = jnp.repeat(mask, num_heads, axis=0)        # (b outer, h inner)
    w = p * mask_nhead
    o = jnp.einsum("bts,bsd->btd", w, v)
    o = o.transpose(1, 0, 2).reshape(tgt_len, bsz, embed_dim)
    o = o @ params["out_proj_weight"].T + params["out_proj_bias"]
    w = w.reshape(bsz, num_heads, tgt_len, src_len)
    return o, w


def _xavier_uniform(key, shape):
    fan_out, fan_in = shape
    limit = math.sqrt(6.0 / (fan_in + fan_out))
    return jax.random.uniform(key, shape, jnp.float32, -limit, limit)


if __name__ == "__main__":
    embed_dim, num_heads = 32, 4
    tgt_len, src_len, bsz = 8, 16, 2

    root = jax.random.PRNGKey(0)
    k_q, k_k, k_v, k_m, k_w1, k_w2, k_b1, k_b2 = jax.random.split(root, 8)

    query = jax.random.normal(k_q, (tgt_len, bsz, embed_dim), jnp.float32)
    key = jax.random.normal(k_k, (src_len, bsz, embed_dim), jnp.float32)
    value = jax.random.normal(k_v, (src_len, bsz, embed_dim), jnp.float32)
    proposal_mask = jax.random.uniform(k_m, (bsz, tgt_len, src_len), jnp.float32)

    # TODO(synk): the reference module never constructs out_proj when
    # multiheadAtten is None; we synthesize a deterministic out_proj here.
    # Biases are non-zero (unlike the module's zero-init) to exercise the
    # bias-add path; the in-script reference uses the same params.
    params = {
        "in_proj_weight": _xavier_uniform(k_w1, (3 * embed_dim, embed_dim)),
        "in_proj_bias": 0.1 * jax.random.normal(k_b1, (3 * embed_dim,), jnp.float32),
        "out_proj_weight": _xavier_uniform(k_w2, (embed_dim, embed_dim)),
        "out_proj_bias": 0.1 * jax.random.normal(k_b2, (embed_dim,), jnp.float32),
    }

    attn_out, aux, attn_weights = multi_head_attention_my(
        query, key, value, proposal_mask, params, num_heads
    )
    jax.block_until_ready(attn_out)
    jax.block_until_ready(attn_weights)
    jax.block_until_ready(aux[0])

    ref_out, ref_w = reference_forward(
        query, key, value, proposal_mask, params, num_heads
    )
    # Tolerances relaxed slightly (approx=True EUP reciprocal in the softmax
    # denominator; ~1e-4 relative error, well inside 1e-3).
    assert jnp.allclose(attn_out, ref_out, atol=2e-3, rtol=2e-3)
    assert jnp.allclose(attn_weights, ref_w, atol=2e-3, rtol=2e-3)
    assert jnp.allclose(aux[0], jnp.sum(ref_w, axis=1) / num_heads,
                        atol=2e-3, rtol=2e-3)

    print("KERNEL_OK")
</pallas_src>

<mosaic_0001>
module attributes {stable_mosaic.version = 11 : i64} {
  func.func @_fused_mha_kernel(%arg0: i32, %arg1: i32, %arg2: memref<1x8x32xf32, #tpu.memory_space<vmem>>, %arg3: memref<1x16x32xf32, #tpu.memory_space<vmem>>, %arg4: memref<1x16x32xf32, #tpu.memory_space<vmem>>, %arg5: memref<1x8x16xf32, #tpu.memory_space<vmem>>, %arg6: memref<32x32xf32, #tpu.memory_space<vmem>>, %arg7: memref<32x32xf32, #tpu.memory_space<vmem>>, %arg8: memref<32x32xf32, #tpu.memory_space<vmem>>, %arg9: memref<1x32xf32, #tpu.memory_space<vmem>>, %arg10: memref<1x32xf32, #tpu.memory_space<vmem>>, %arg11: memref<1x32xf32, #tpu.memory_space<vmem>>, %arg12: memref<32x32xf32, #tpu.memory_space<vmem>>, %arg13: memref<1x32xf32, #tpu.memory_space<vmem>>, %arg14: memref<1x8x32xf32, #tpu.memory_space<vmem>>, %arg15: memref<1x4x8x16xf32, #tpu.memory_space<vmem>>, %arg16: memref<1x8x16xf32, #tpu.memory_space<vmem>>) attributes {dimension_semantics = [#tpu.dimension_semantics<parallel>, #tpu.dimension_semantics<parallel>], iteration_bounds = array<i64: 2, 1>, scalar_prefetch = 0 : i64, scratch_operands = 0 : i64, tpu.core_type = #tpu.core_type<tc>, window_params = [{transform_indices = @transform_0, window_bounds = array<i64: 1, 8, 32>}, {transform_indices = @transform_1, window_bounds = array<i64: 1, 16, 32>}, {transform_indices = @transform_2, window_bounds = array<i64: 1, 16, 32>}, {transform_indices = @transform_3, window_bounds = array<i64: 1, 8, 16>}, {pipeline_mode = #tpu.pipeline_mode<synchronous>, transform_indices = @transform_4, window_bounds = array<i64: 32, 32>}, {pipeline_mode = #tpu.pipeline_mode<synchronous>, transform_indices = @transform_5, window_bounds = array<i64: 32, 32>}, {pipeline_mode = #tpu.pipeline_mode<synchronous>, transform_indices = @transform_6, window_bounds = array<i64: 32, 32>}, {pipeline_mode = #tpu.pipeline_mode<synchronous>, transform_indices = @transform_7, window_bounds = array<i64: 1, 32>}, {pipeline_mode = #tpu.pipeline_mode<synchronous>, transform_indices = @transform_8, window_bounds = array<i64: 1, 32>}, {pipeline_mode = #tpu.pipeline_mode<synchronous>, transform_indices = @transform_9, window_bounds = array<i64: 1, 32>}, {pipeline_mode = #tpu.pipeline_mode<synchronous>, transform_indices = @transform_10, window_bounds = array<i64: 32, 32>}, {pipeline_mode = #tpu.pipeline_mode<synchronous>, transform_indices = @transform_11, window_bounds = array<i64: 1, 32>}, {transform_indices = @transform_12, window_bounds = array<i64: 1, 8, 32>}, {transform_indices = @transform_13, window_bounds = array<i64: 1, 4, 8, 16>}, {transform_indices = @transform_14, window_bounds = array<i64: 1, 8, 16>}]} {
    %c0 = arith.constant 0 : index
    %c0_0 = arith.constant 0 : index
    %c0_1 = arith.constant 0 : index
    %0 = vector.load %arg2[%c0, %c0_0, %c0_1] : memref<1x8x32xf32, #tpu.memory_space<vmem>>, vector<1x8x32xf32>
    %1 = vector.shape_cast %0 : vector<1x8x32xf32> to vector<8x32xf32>
    %c0_2 = arith.constant 0 : index
    %c0_3 = arith.constant 0 : index
    %c0_4 = arith.constant 0 : index
    %2 = vector.load %arg3[%c0_2, %c0_3, %c0_4] : memref<1x16x32xf32, #tpu.memory_space<vmem>>, vector<1x16x32xf32>
    %3 = vector.shape_cast %2 : vector<1x16x32xf32> to vector<16x32xf32>
    %c0_5 = arith.constant 0 : index
    %c0_6 = arith.constant 0 : index
    %c0_7 = arith.constant 0 : index
    %4 = vector.load %arg4[%c0_5, %c0_6, %c0_7] : memref<1x16x32xf32, #tpu.memory_space<vmem>>, vector<1x16x32xf32>
    %5 = vector.shape_cast %4 : vector<1x16x32xf32> to vector<16x32xf32>
    %c0_8 = arith.constant 0 : index
    %c0_9 = arith.constant 0 : index
    %c0_10 = arith.constant 0 : index
    %6 = vector.load %arg5[%c0_8, %c0_9, %c0_10] : memref<1x8x16xf32, #tpu.memory_space<vmem>>, vector<1x8x16xf32>
    %7 = vector.shape_cast %6 : vector<1x8x16xf32> to vector<8x16xf32>
    %c0_11 = arith.constant 0 : index
    %c0_12 = arith.constant 0 : index
    %8 = vector.load %arg6[%c0_11, %c0_12] : memref<32x32xf32, #tpu.memory_space<vmem>>, vector<32x32xf32>
    %cst = arith.constant dense<0.000000e+00> : vector<8x32xf32>
    %9 = tpu.matmul %1, %8, %cst {dimension_numbers = #tpu.dot_dimension_numbers<[1], [1], [0], [0], [0, 0, 1, 0], [], []>} : vector<8x32xf32>, vector<32x32xf32>, vector<8x32xf32> -> vector<8x32xf32>
    %c0_13 = arith.constant 0 : index
    %c0_14 = arith.constant 0 : index
    %10 = vector.load %arg9[%c0_13, %c0_14] : memref<1x32xf32, #tpu.memory_space<vmem>>, vector<1x32xf32>
    %11 = vector.broadcast %10 : vector<1x32xf32> to vector<8x32xf32>
    %12 = arith.addf %9, %11 : vector<8x32xf32>
    %c0_15 = arith.constant 0 : index
    %c0_16 = arith.constant 0 : index
    %13 = vector.load %arg7[%c0_15, %c0_16] : memref<32x32xf32, #tpu.memory_space<vmem>>, vector<32x32xf32>
    %cst_17 = arith.constant dense<0.000000e+00> : vector<16x32xf32>
    %14 = tpu.matmul %3, %13, %cst_17 {dimension_numbers = #tpu.dot_dimension_numbers<[1], [1], [0], [0], [0, 0, 1, 0], [], []>} : vector<16x32xf32>, vector<32x32xf32>, vector<16x32xf32> -> vector<16x32xf32>
    %c0_18 = arith.constant 0 : index
    %c0_19 = arith.constant 0 : index
    %15 = vector.load %arg10[%c0_18, %c0_19] : memref<1x32xf32, #tpu.memory_space<vmem>>, vector<1x32xf32>
    %16 = vector.broadcast %15 : vector<1x32xf32> to vector<16x32xf32>
    %17 = arith.addf %14, %16 : vector<16x32xf32>
    %c0_20 = arith.constant 0 : index
    %c0_21 = arith.constant 0 : index
    %18 = vector.load %arg8[%c0_20, %c0_21] : memref<32x32xf32, #tpu.memory_space<vmem>>, vector<32x32xf32>
    %cst_22 = arith.constant dense<0.000000e+00> : vector<16x32xf32>
    %19 = tpu.matmul %5, %18, %cst_22 {dimension_numbers = #tpu.dot_dimension_numbers<[1], [1], [0], [0], [0, 0, 1, 0], [], []>} : vector<16x32xf32>, vector<32x32xf32>, vector<16x32xf32> -> vector<16x32xf32>
    %c0_23 = arith.constant 0 : index
    %c0_24 = arith.constant 0 : index
    %20 = vector.load %arg11[%c0_23, %c0_24] : memref<1x32xf32, #tpu.memory_space<vmem>>, vector<1x32xf32>
    %21 = vector.broadcast %20 : vector<1x32xf32> to vector<16x32xf32>
    %22 = arith.addf %19, %21 : vector<16x32xf32>
    %c0_25 = arith.constant 0 : index
    %c0_26 = arith.constant 0 : index
    %23 = vector.load %arg12[%c0_25, %c0_26] : memref<32x32xf32, #tpu.memory_space<vmem>>, vector<32x32xf32>
    %24 = vector.extract_strided_slice %12 {offsets = [0, 0], sizes = [8, 8], strides = [1, 1]} : vector<8x32xf32> to vector<8x8xf32>
    %25 = vector.extract_strided_slice %17 {offsets = [0, 0], sizes = [16, 8], strides = [1, 1]} : vector<16x32xf32> to vector<16x8xf32>
    %26 = vector.extract_strided_slice %22 {offsets = [0, 0], sizes = [16, 8], strides = [1, 1]} : vector<16x32xf32> to vector<16x8xf32>
    %cst_27 = arith.constant dense<0.000000e+00> : vector<8x16xf32>
    %27 = tpu.matmul %24, %25, %cst_27 {dimension_numbers = #tpu.dot_dimension_numbers<[1], [1], [0], [0], [0, 0, 1, 0], [], []>} : vector<8x8xf32>, vector<16x8xf32>, vector<8x16xf32> -> vector<8x16xf32>
    %cst_28 = arith.constant dense<0xFF800000> : vector<8xf32>
    %28 = vector.multi_reduction <maximumf>, %27, %cst_28 [1] : vector<8x16xf32> to vector<8xf32>
    %29 = vector.shape_cast %28 : vector<8xf32> to vector<8x1xf32>
    %30 = vector.broadcast %29 : vector<8x1xf32> to vector<8x16xf32>
    %31 = arith.subf %27, %30 : vector<8x16xf32>
    %32 = math.exp %31 : vector<8x16xf32>
    %cst_29 = arith.constant dense<0.000000e+00> : vector<8xf32>
    %33 = vector.multi_reduction <add>, %32, %cst_29 [1] : vector<8x16xf32> to vector<8xf32>
    %34 = vector.shape_cast %33 : vector<8xf32> to vector<8x1xf32>
    %35 = tpu.reciprocal %34 {approx = true} : vector<8x1xf32> -> vector<8x1xf32>
    %36 = vector.broadcast %35 : vector<8x1xf32> to vector<8x16xf32>
    %37 = arith.mulf %7, %36 : vector<8x16xf32>
    %38 = arith.mulf %32, %37 : vector<8x16xf32>
    %c0_30 = arith.constant 0 : index
    %c0_31 = arith.constant 0 : index
    %c0_32 = arith.constant 0 : index
    %c0_33 = arith.constant 0 : index
    %39 = vector.load %arg15[%c0_30, %c0_31, %c0_32, %c0_33] : memref<1x4x8x16xf32, #tpu.memory_space<vmem>>, vector<1x1x8x16xf32>
    %40 = vector.shape_cast %39 : vector<1x1x8x16xf32> to vector<8x16xf32>
    %41 = vector.shape_cast %38 : vector<8x16xf32> to vector<1x1x8x16xf32>
    tpu.vector_store %arg15[%c0_30, %c0_31, %c0_32, %c0_33], %41 {strides = array<i32>} : memref<1x4x8x16xf32, #tpu.memory_space<vmem>>, vector<1x1x8x16xf32>,
    %cst_34 = arith.constant dense<0.000000e+00> : vector<8x8xf32>
    %42 = tpu.matmul %38, %26, %cst_34 {dimension_numbers = #tpu.dot_dimension_numbers<[1], [0], [0], [1], [0, 0, 1, 1], [], []>} : vector<8x16xf32>, vector<16x8xf32>, vector<8x8xf32> -> vector<8x8xf32>
    %43 = vector.extract_strided_slice %23 {offsets = [0, 0], sizes = [32, 8], strides = [1, 1]} : vector<32x32xf32> to vector<32x8xf32>
    %cst_35 = arith.constant dense<0.000000e+00> : vector<8x32xf32>
    %44 = tpu.matmul %42, %43, %cst_35 {dimension_numbers = #tpu.dot_dimension_numbers<[1], [1], [0], [0], [0, 0, 1, 0], [], []>} : vector<8x8xf32>, vector<32x8xf32>, vector<8x32xf32> -> vector<8x32xf32>
    %45 = vector.extract_strided_slice %12 {offsets = [0, 8], sizes = [8, 8], strides = [1, 1]} : vector<8x32xf32> to vector<8x8xf32>
    %46 = vector.extract_strided_slice %17 {offsets = [0, 8], sizes = [16, 8], strides = [1, 1]} : vector<16x32xf32> to vector<16x8xf32>
    %47 = vector.extract_strided_slice %22 {offsets = [0, 8], sizes = [16, 8], strides = [1, 1]} : vector<16x32xf32> to vector<16x8xf32>
    %cst_36 = arith.constant dense<0.000000e+00> : vector<8x16xf32>
    %48 = tpu.matmul %45, %46, %cst_36 {dimension_numbers = #tpu.dot_dimension_numbers<[1], [1], [0], [0], [0, 0, 1, 0], [], []>} : vector<8x8xf32>, vector<16x8xf32>, vector<8x16xf32> -> vector<8x16xf32>
    %cst_37 = arith.constant dense<0xFF800000> : vector<8xf32>
    %49 = vector.multi_reduction <maximumf>, %48, %cst_37 [1] : vector<8x16xf32> to vector<8xf32>
    %50 = vector.shape_cast %49 : vector<8xf32> to vector<8x1xf32>
    %51 = vector.broadcast %50 : vector<8x1xf32> to vector<8x16xf32>
    %52 = arith.subf %48, %51 : vector<8x16xf32>
    %53 = math.exp %52 : vector<8x16xf32>
    %cst_38 = arith.constant dense<0.000000e+00> : vector<8xf32>
    %54 = vector.multi_reduction <add>, %53, %cst_38 [1] : vector<8x16xf32> to vector<8xf32>
    %55 = vector.shape_cast %54 : vector<8xf32> to vector<8x1xf32>
    %56 = tpu.reciprocal %55 {approx = true} : vector<8x1xf32> -> vector<8x1xf32>
    %57 = vector.broadcast %56 : vector<8x1xf32> to vector<8x16xf32>
    %58 = arith.mulf %7, %57 : vector<8x16xf32>
    %59 = arith.mulf %53, %58 : vector<8x16xf32>
    %c0_39 = arith.constant 0 : index
    %c1 = arith.constant 1 : index
    %c0_40 = arith.constant 0 : index
    %c0_41 = arith.constant 0 : index
    %60 = vector.load %arg15[%c0_39, %c1, %c0_40, %c0_41] : memref<1x4x8x16xf32, #tpu.memory_space<vmem>>, vector<1x1x8x16xf32>
    %61 = vector.shape_cast %60 : vector<1x1x8x16xf32> to vector<8x16xf32>
    %62 = vector.shape_cast %59 : vector<8x16xf32> to vector<1x1x8x16xf32>
    tpu.vector_store %arg15[%c0_39, %c1, %c0_40, %c0_41], %62 {strides = array<i32>} : memref<1x4x8x16xf32, #tpu.memory_space<vmem>>, vector<1x1x8x16xf32>,
    %63 = arith.addf %38, %59 : vector<8x16xf32>
    %cst_42 = arith.constant dense<0.000000e+00> : vector<8x8xf32>
    %64 = tpu.matmul %59, %47, %cst_42 {dimension_numbers = #tpu.dot_dimension_numbers<[1], [0], [0], [1], [0, 0, 1, 1], [], []>} : vector<8x16xf32>, vector<16x8xf32>, vector<8x8xf32> -> vector<8x8xf32>
    %65 = vector.extract_strided_slice %23 {offsets = [0, 8], sizes = [32, 8], strides = [1, 1]} : vector<32x32xf32> to vector<32x8xf32>
    %cst_43 = arith.constant dense<0.000000e+00> : vector<8x32xf32>
    %66 = tpu.matmul %64, %65, %cst_43 {dimension_numbers = #tpu.dot_dimension_numbers<[1], [1], [0], [0], [0, 0, 1, 0], [], []>} : vector<8x8xf32>, vector<32x8xf32>, vector<8x32xf32> -> vector<8x32xf32>
    %67 = arith.addf %44, %66 : vector<8x32xf32>
    %68 = vector.extract_strided_slice %12 {offsets = [0, 16], sizes = [8, 8], strides = [1, 1]} : vector<8x32xf32> to vector<8x8xf32>
    %69 = vector.extract_strided_slice %17 {offsets = [0, 16], sizes = [16, 8], strides = [1, 1]} : vector<16x32xf32> to vector<16x8xf32>
    %70 = vector.extract_strided_slice %22 {offsets = [0, 16], sizes = [16, 8], strides = [1, 1]} : vector<16x32xf32> to vector<16x8xf32>
    %cst_44 = arith.constant dense<0.000000e+00> : vector<8x16xf32>
    %71 = tpu.matmul %68, %69, %cst_44 {dimension_numbers = #tpu.dot_dimension_numbers<[1], [1], [0], [0], [0, 0, 1, 0], [], []>} : vector<8x8xf32>, vector<16x8xf32>, vector<8x16xf32> -> vector<8x16xf32>
    %cst_45 = arith.constant dense<0xFF800000> : vector<8xf32>
    %72 = vector.multi_reduction <maximumf>, %71, %cst_45 [1] : vector<8x16xf32> to vector<8xf32>
    %73 = vector.shape_cast %72 : vector<8xf32> to vector<8x1xf32>
    %74 = vector.broadcast %73 : vector<8x1xf32> to vector<8x16xf32>
    %75 = arith.subf %71, %74 : vector<8x16xf32>
    %76 = math.exp %75 : vector<8x16xf32>
    %cst_46 = arith.constant dense<0.000000e+00> : vector<8xf32>
    %77 = vector.multi_reduction <add>, %76, %cst_46 [1] : vector<8x16xf32> to vector<8xf32>
    %78 = vector.shape_cast %77 : vector<8xf32> to vector<8x1xf32>
    %79 = tpu.reciprocal %78 {approx = true} : vector<8x1xf32> -> vector<8x1xf32>
    %80 = vector.broadcast %79 : vector<8x1xf32> to vector<8x16xf32>
    %81 = arith.mulf %7, %80 : vector<8x16xf32>
    %82 = arith.mulf %76, %81 : vector<8x16xf32>
    %c0_47 = arith.constant 0 : index
    %c2 = arith.constant 2 : index
    %c0_48 = arith.constant 0 : index
    %c0_49 = arith.constant 0 : index
    %83 = vector.load %arg15[%c0_47, %c2, %c0_48, %c0_49] : memref<1x4x8x16xf32, #tpu.memory_space<vmem>>, vector<1x1x8x16xf32>
    %84 = vector.shape_cast %83 : vector<1x1x8x16xf32> to vector<8x16xf32>
    %85 = vector.shape_cast %82 : vector<8x16xf32> to vector<1x1x8x16xf32>
    tpu.vector_store %arg15[%c0_47, %c2, %c0_48, %c0_49], %85 {strides = array<i32>} : memref<1x4x8x16xf32, #tpu.memory_space<vmem>>, vector<1x1x8x16xf32>,
    %86 = arith.addf %63, %82 : vector<8x16xf32>
    %cst_50 = arith.constant dense<0.000000e+00> : vector<8x8xf32>
    %87 = tpu.matmul %82, %70, %cst_50 {dimension_numbers = #tpu.dot_dimension_numbers<[1], [0], [0], [1], [0, 0, 1, 1], [], []>} : vector<8x16xf32>, vector<16x8xf32>, vector<8x8xf32> -> vector<8x8xf32>
    %88 = vector.extract_strided_slice %23 {offsets = [0, 16], sizes = [32, 8], strides = [1, 1]} : vector<32x32xf32> to vector<32x8xf32>
    %cst_51 = arith.constant dense<0.000000e+00> : vector<8x32xf32>
    %89 = tpu.matmul %87, %88, %cst_51 {dimension_numbers = #tpu.dot_dimension_numbers<[1], [1], [0], [0], [0, 0, 1, 0], [], []>} : vector<8x8xf32>, vector<32x8xf32>, vector<8x32xf32> -> vector<8x32xf32>
    %90 = arith.addf %67, %89 : vector<8x32xf32>
    %91 = vector.extract_strided_slice %12 {offsets = [0, 24], sizes = [8, 8], strides = [1, 1]} : vector<8x32xf32> to vector<8x8xf32>
    %92 = vector.extract_strided_slice %17 {offsets = [0, 24], sizes = [16, 8], strides = [1, 1]} : vector<16x32xf32> to vector<16x8xf32>
    %93 = vector.extract_strided_slice %22 {offsets = [0, 24], sizes = [16, 8], strides = [1, 1]} : vector<16x32xf32> to vector<16x8xf32>
    %cst_52 = arith.constant dense<0.000000e+00> : vector<8x16xf32>
    %94 = tpu.matmul %91, %92, %cst_52 {dimension_numbers = #tpu.dot_dimension_numbers<[1], [1], [0], [0], [0, 0, 1, 0], [], []>} : vector<8x8xf32>, vector<16x8xf32>, vector<8x16xf32> -> vector<8x16xf32>
    %cst_53 = arith.constant dense<0xFF800000> : vector<8xf32>
    %95 = vector.multi_reduction <maximumf>, %94, %cst_53 [1] : vector<8x16xf32> to vector<8xf32>
    %96 = vector.shape_cast %95 : vector<8xf32> to vector<8x1xf32>
    %97 = vector.broadcast %96 : vector<8x1xf32> to vector<8x16xf32>
    %98 = arith.subf %94, %97 : vector<8x16xf32>
    %99 = math.exp %98 : vector<8x16xf32>
    %cst_54 = arith.constant dense<0.000000e+00> : vector<8xf32>
    %100 = vector.multi_reduction <add>, %99, %cst_54 [1] : vector<8x16xf32> to vector<8xf32>
    %101 = vector.shape_cast %100 : vector<8xf32> to vector<8x1xf32>
    %102 = tpu.reciprocal %101 {approx = true} : vector<8x1xf32> -> vector<8x1xf32>
    %103 = vector.broadcast %102 : vector<8x1xf32> to vector<8x16xf32>
    %104 = arith.mulf %7, %103 : vector<8x16xf32>
    %105 = arith.mulf %99, %104 : vector<8x16xf32>
    %c0_55 = arith.constant 0 : index
    %c3 = arith.constant 3 : index
    %c0_56 = arith.constant 0 : index
    %c0_57 = arith.constant 0 : index
    %106 = vector.load %arg15[%c0_55, %c3, %c0_56, %c0_57] : memref<1x4x8x16xf32, #tpu.memory_space<vmem>>, vector<1x1x8x16xf32>
    %107 = vector.shape_cast %106 : vector<1x1x8x16xf32> to vector<8x16xf32>
    %108 = vector.shape_cast %105 : vector<8x16xf32> to vector<1x1x8x16xf32>
    tpu.vector_store %arg15[%c0_55, %c3, %c0_56, %c0_57], %108 {strides = array<i32>} : memref<1x4x8x16xf32, #tpu.memory_space<vmem>>, vector<1x1x8x16xf32>,
    %109 = arith.addf %86, %105 : vector<8x16xf32>
    %cst_58 = arith.constant dense<0.000000e+00> : vector<8x8xf32>
    %110 = tpu.matmul %105, %93, %cst_58 {dimension_numbers = #tpu.dot_dimension_numbers<[1], [0], [0], [1], [0, 0, 1, 1], [], []>} : vector<8x16xf32>, vector<16x8xf32>, vector<8x8xf32> -> vector<8x8xf32>
    %111 = vector.extract_strided_slice %23 {offsets = [0, 24], sizes = [32, 8], strides = [1, 1]} : vector<32x32xf32> to vector<32x8xf32>
    %cst_59 = arith.constant dense<0.000000e+00> : vector<8x32xf32>
    %112 = tpu.matmul %110, %111, %cst_59 {dimension_numbers = #tpu.dot_dimension_numbers<[1], [1], [0], [0], [0, 0, 1, 0], [], []>} : vector<8x8xf32>, vector<32x8xf32>, vector<8x32xf32> -> vector<8x32xf32>
    %113 = arith.addf %90, %112 : vector<8x32xf32>
    %cst_60 = arith.constant 2.500000e-01 : f32
    %114 = vector.broadcast %cst_60 : f32 to vector<8x16xf32>
    %115 = arith.mulf %109, %114 : vector<8x16xf32>
    %c0_61 = arith.constant 0 : index
    %c0_62 = arith.constant 0 : index
    %c0_63 = arith.constant 0 : index
    %116 = vector.load %arg16[%c0_61, %c0_62, %c0_63] : memref<1x8x16xf32, #tpu.memory_space<vmem>>, vector<1x8x16xf32>
    %117 = vector.shape_cast %116 : vector<1x8x16xf32> to vector<8x16xf32>
    %118 = vector.shape_cast %115 : vector<8x16xf32> to vector<1x8x16xf32>
    tpu.vector_store %arg16[%c0_61, %c0_62, %c0_63], %118 {strides = array<i32>} : memref<1x8x16xf32, #tpu.memory_space<vmem>>, vector<1x8x16xf32>,
    %c0_64 = arith.constant 0 : index
    %c0_65 = arith.constant 0 : index
    %119 = vector.load %arg13[%c0_64, %c0_65] : memref<1x32xf32, #tpu.memory_space<vmem>>, vector<1x32xf32>
    %120 = vector.broadcast %119 : vector<1x32xf32> to vector<8x32xf32>
    %121 = arith.addf %113, %120 : vector<8x32xf32>
    %c0_66 = arith.constant 0 : index
    %c0_67 = arith.constant 0 : index
    %c0_68 = arith.constant 0 : index
    %122 = vector.load %arg14[%c0_66, %c0_67, %c0_68] : memref<1x8x32xf32, #tpu.memory_space<vmem>>, vector<1x8x32xf32>
    %123 = vector.shape_cast %122 : vector<1x8x32xf32> to vector<8x32xf32>
    %124 = vector.shape_cast %121 : vector<8x32xf32> to vector<1x8x32xf32>
    tpu.vector_store %arg14[%c0_66, %c0_67, %c0_68], %124 {strides = array<i32>} : memref<1x8x32xf32, #tpu.memory_space<vmem>>, vector<1x8x32xf32>,
    return
  }
  func.func @transform_0(%arg0: i32, %arg1: i32) -> (i32, i32, i32) {
    %c0_i32 = arith.constant 0 : i32
    %c0_i32_0 = arith.constant 0 : i32
    return %arg0, %arg1, %c0_i32 : i32, i32, i32
  }
  func.func @transform_1(%arg0: i32, %arg1: i32) -> (i32, i32, i32) {
    %c0_i32 = arith.constant 0 : i32
    %c0_i32_0 = arith.constant 0 : i32
    %c0_i32_1 = arith.constant 0 : i32
    return %arg0, %c0_i32, %c0_i32_0 : i32, i32, i32
  }
  func.func @transform_2(%arg0: i32, %arg1: i32) -> (i32, i32, i32) {
    %c0_i32 = arith.constant 0 : i32
    %c0_i32_0 = arith.constant 0 : i32
    %c0_i32_1 = arith.constant 0 : i32
    return %arg0, %c0_i32, %c0_i32_0 : i32, i32, i32
  }
  func.func @transform_3(%arg0: i32, %arg1: i32) -> (i32, i32, i32) {
    %c0_i32 = arith.constant 0 : i32
    %c0_i32_0 = arith.constant 0 : i32
    return %arg0, %arg1, %c0_i32 : i32, i32, i32
  }
  func.func @transform_4(%arg0: i32, %arg1: i32) -> (i32, i32) {
    %c0_i32 = arith.constant 0 : i32
    %c0_i32_0 = arith.constant 0 : i32
    %c0_i32_1 = arith.constant 0 : i32
    return %c0_i32, %c0_i32_0 : i32, i32
  }
  func.func @transform_5(%arg0: i32, %arg1: i32) -> (i32, i32) {
    %c0_i32 = arith.constant 0 : i32
    %c0_i32_0 = arith.constant 0 : i32
    %c0_i32_1 = arith.constant 0 : i32
    return %c0_i32, %c0_i32_0 : i32, i32
  }
  func.func @transform_6(%arg0: i32, %arg1: i32) -> (i32, i32) {
    %c0_i32 = arith.constant 0 : i32
    %c0_i32_0 = arith.constant 0 : i32
    %c0_i32_1 = arith.constant 0 : i32
    return %c0_i32, %c0_i32_0 : i32, i32
  }
  func.func @transform_7(%arg0: i32, %arg1: i32) -> (i32, i32) {
    %c0_i32 = arith.constant 0 : i32
    %c0_i32_0 = arith.constant 0 : i32
    %c0_i32_1 = arith.constant 0 : i32
    return %c0_i32, %c0_i32_0 : i32, i32
  }
  func.func @transform_8(%arg0: i32, %arg1: i32) -> (i32, i32) {
    %c0_i32 = arith.constant 0 : i32
    %c0_i32_0 = arith.constant 0 : i32
    %c0_i32_1 = arith.constant 0 : i32
    return %c0_i32, %c0_i32_0 : i32, i32
  }
  func.func @transform_9(%arg0: i32, %arg1: i32) -> (i32, i32) {
    %c0_i32 = arith.constant 0 : i32
    %c0_i32_0 = arith.constant 0 : i32
    %c0_i32_1 = arith.constant 0 : i32
    return %c0_i32, %c0_i32_0 : i32, i32
  }
  func.func @transform_10(%arg0: i32, %arg1: i32) -> (i32, i32) {
    %c0_i32 = arith.constant 0 : i32
    %c0_i32_0 = arith.constant 0 : i32
    %c0_i32_1 = arith.constant 0 : i32
    return %c0_i32, %c0_i32_0 : i32, i32
  }
  func.func @transform_11(%arg0: i32, %arg1: i32) -> (i32, i32) {
    %c0_i32 = arith.constant 0 : i32
    %c0_i32_0 = arith.constant 0 : i32
    %c0_i32_1 = arith.constant 0 : i32
    return %c0_i32, %c0_i32_0 : i32, i32
  }
  func.func @transform_12(%arg0: i32, %arg1: i32) -> (i32, i32, i32) {
    %c0_i32 = arith.constant 0 : i32
    %c0_i32_0 = arith.constant 0 : i32
    return %arg0, %arg1, %c0_i32 : i32, i32, i32
  }
  func.func @transform_13(%arg0: i32, %arg1: i32) -> (i32, i32, i32, i32) {
    %c0_i32 = arith.constant 0 : i32
    %c0_i32_0 = arith.constant 0 : i32
    %c0_i32_1 = arith.constant 0 : i32
    return %arg0, %c0_i32, %arg1, %c0_i32_0 : i32, i32, i32, i32
  }
  func.func @transform_14(%arg0: i32, %arg1: i32) -> (i32, i32, i32) {
    %c0_i32 = arith.constant 0 : i32
    %c0_i32_0 = arith.constant 0 : i32
    return %arg0, %arg1, %c0_i32 : i32, i32, i32
  }
}

</mosaic_0001>

<llo_original>
// kernel: tpu_custom_call.1
$region0: #{tpu_custom_call.1}
  #allocation0 [shape = 'u32[]', space=smem, size = 0x4, offset = 0x4, fixed_abs, tag = 'smem constant byte address 0x4 - core index']
  #allocation1 [shape = 'u32[144,128]{1,0:T(1,128)}', space=vmem, size = 0x12000, scoped, tag = 'internal scratch']
  %s0 = inlined_call_operand.hbm [shape: f32[2,8,32], index: 0, kind: input, shape index: {}]
  %s1 = inlined_call_operand.hbm [shape: f32[2,16,32], index: 1, kind: input, shape index: {}]
  %s2 = inlined_call_operand.hbm [shape: f32[2,16,32], index: 2, kind: input, shape index: {}]
  %s3 = inlined_call_operand.hbm [shape: f32[2,8,16], index: 3, kind: input, shape index: {}]
  %s4 = inlined_call_operand.hbm [shape: f32[32,32], index: 4, kind: input, shape index: {}]
  %s5 = inlined_call_operand.hbm [shape: f32[32,32], index: 5, kind: input, shape index: {}]
  %s6 = inlined_call_operand.hbm [shape: f32[32,32], index: 6, kind: input, shape index: {}]
  %s7 = inlined_call_operand.hbm [shape: f32[1,32], index: 7, kind: input, shape index: {}]
  %s8 = inlined_call_operand.hbm [shape: f32[1,32], index: 8, kind: input, shape index: {}]
  %s9 = inlined_call_operand.hbm [shape: f32[1,32], index: 9, kind: input, shape index: {}]
  %s10 = inlined_call_operand.hbm [shape: f32[32,32], index: 10, kind: input, shape index: {}]
  %s11 = inlined_call_operand.hbm [shape: f32[1,32], index: 11, kind: input, shape index: {}]
  %s12 = inlined_call_operand.hbm [shape: f32[2,8,32], index: 12, kind: output, shape index: {0}]
  %s13 = inlined_call_operand.hbm [shape: f32[2,4,8,16], index: 13, kind: output, shape index: {1}]
  %s14 = inlined_call_operand.hbm [shape: f32[2,8,16], index: 14, kind: output, shape index: {2}]
  %15 = xla_tuple %s12, %s13, %s14
  %s16 = sld [smem:[#allocation0]]
  $region145: #{tpu_custom_call.1} parent=0
    _
  %s18 = ssub.s32 1, %s16
  %s19 = scalar_select 0, %s18, %s16
  $region1: #{tpu_custom_call.1} parent=0
    #allocation2 [shape = 'u8[8192]{0}', space=vmem, size = 0x2000, scoped, tag = 'input window, operand 0']
    #allocation3 [shape = 's32[2]{0}', space=sflag, size = 0x8, scoped, tag = 'scoped memory for tpu_custom_call.1']
    #allocation4 [shape = 's32[2]{0}', space=sflag, size = 0x8, scoped, tag = 'scoped memory for tpu_custom_call.1']
    #allocation5 [shape = 'u8[16384]{0}', space=vmem, size = 0x4000, scoped, tag = 'input window, operand 1']
    #allocation6 [shape = 's32[2]{0}', space=sflag, size = 0x8, scoped, tag = 'scoped memory for tpu_custom_call.1']
    #allocation7 [shape = 'u8[16384]{0}', space=vmem, size = 0x4000, scoped, tag = 'input window, operand 2']
    #allocation8 [shape = 'u8[8192]{0}', space=vmem, size = 0x2000, scoped, tag = 'input window, operand 3']
    #allocation9 [shape = 's32[2]{0}', space=sflag, size = 0x8, scoped, tag = 'scoped memory for tpu_custom_call.1']
    #allocation10 [shape = 'u8[16384]{0}', space=vmem, size = 0x4000, scoped, tag = 'input window, operand 4, single buffered']
    #allocation11 [shape = 'u8[16384]{0}', space=vmem, size = 0x4000, scoped, tag = 'input window, operand 5, single buffered']
    #allocation12 [shape = 's32[1]{0}', space=sflag, size = 0x4, scoped, tag = 'scoped memory for tpu_custom_call.1']
    #allocation13 [shape = 'u8[16384]{0}', space=vmem, size = 0x4000, scoped, tag = 'input window, operand 6, single buffered']
    #allocation14 [shape = 'u8[512]{0}', space=vmem, size = 0x400, scoped, tag = 'input window, operand 7, single buffered']
    #allocation15 [shape = 's32[1]{0}', space=sflag, size = 0x4, scoped, tag = 'scoped memory for tpu_custom_call.1']
    #allocation16 [shape = 'u8[512]{0}', space=vmem, size = 0x400, scoped, tag = 'input window, operand 8, single buffered']
    #allocation17 [shape = 'u8[512]{0}', space=vmem, size = 0x400, scoped, tag = 'input window, operand 9, single buffered']
    #allocation18 [shape = 's32[1]{0}', space=sflag, size = 0x4, scoped, tag = 'scoped memory for tpu_custom_call.1']
    #allocation19 [shape = 'u8[16384]{0}', space=vmem, size = 0x4000, scoped, tag = 'input window, operand 10, single buffered']
    #allocation20 [shape = 'u8[512]{0}', space=vmem, size = 0x400, scoped, tag = 'input window, operand 11, single buffered']
    #allocation21 [shape = 's32[1]{0}', space=sflag, size = 0x4, scoped, tag = 'scoped memory for tpu_custom_call.1']
    #allocation22 [shape = 'u8[8192]{0}', space=vmem, size = 0x2000, scoped, tag = 'output window, operand 0']
    #allocation23 [shape = 'u8[32768]{0}', space=vmem, size = 0x8000, scoped, tag = 'output window, operand 1']
    #allocation24 [shape = 's32[2]{0}', space=sflag, size = 0x8, scoped, tag = 'scoped memory for tpu_custom_call.1']
    #allocation25 [shape = 'u8[8192]{0}', space=vmem, size = 0x2000, scoped, tag = 'output window, operand 2']
    %20 = vsyncpa [#allocation3], 0
    %s21 = scalar_lea.sflag [#allocation3], 1
    %22 = vsyncpa %s21, 0
    %23 = vsyncpa [#allocation6], 0
    %s24 = scalar_lea.sflag [#allocation6], 1
    %25 = vsyncpa %s24, 0
    %26 = vsyncpa [#allocation9], 0
    %s27 = scalar_lea.sflag [#allocation9], 1
    %28 = vsyncpa %s27, 0
    %29 = vsyncpa [#allocation12], 0
    %30 = vsyncpa [#allocation15], 0
    %31 = vsyncpa [#allocation18], 0
    %32 = vsyncpa [#allocation21], 0
    %33 = vsyncpa [#allocation4], 0
    %s34 = scalar_lea.sflag [#allocation4], 1
    %35 = vsyncpa %s34, 0
    %36 = vsyncpa [#allocation24], 0
    %s37 = scalar_lea.sflag [#allocation24], 1
    %38 = vsyncpa %s37, 0
    loop: start=0, step=1, limit=4
    $region2: #{tpu_custom_call.1} parent=1 // loop_pre_header
      _
    $region3: #{tpu_custom_call.1} parent=1 // loop_header
      %s40 = sphi 0, %s44
      %p41 = scmp.ge.s32.totalorder %s40, 4
      %s47 = sphi 0, %s59
      %s48 = sphi 0, %s55
      %s49 = sphi 0, %s47
      %s50 = sphi 0, %s48
      %s51 = sphi 0, %s49
      %s52 = sphi 0, %s50
      %s64 = sphi 0, %s66
      %s67 = sphi 0, %s64
      %s68 = sphi 0, %s67
      %s84 = sphi 0, %s68
      %s90 = sphi 0, %s92
      %s93 = sphi 0, %s90
      %s94 = sphi 0, %s93
      %s110 = sphi 0, %s94
      %s116 = sphi 0, %s118
      %s119 = sphi 0, %s116
      %s120 = sphi 0, %s119
      %s136 = sphi 0, %s120
      %s144 = sphi 0, %s146
      %s147 = sphi 0, %s144
      %s148 = sphi 0, %s147
      %s164 = sphi 0, %s148
      %s168 = sphi 0, %s168
      %s170 = sphi 0, %s168
      %s171 = sphi 0, %s170
      %s185 = sphi 0, %s171
      %s189 = sphi 0, %s189
      %s191 = sphi 0, %s189
      %s192 = sphi 0, %s191
      %s206 = sphi 0, %s192
      %s210 = sphi 0, %s210
      %s212 = sphi 0, %s210
      %s213 = sphi 0, %s212
      %s227 = sphi 0, %s213
      %s231 = sphi 0, %s231
      %s233 = sphi 0, %s231
      %s234 = sphi 0, %s233
      %s248 = sphi 0, %s234
      %s252 = sphi 0, %s252
      %s254 = sphi 0, %s252
      %s255 = sphi 0, %s254
      %s269 = sphi 0, %s255
      %s273 = sphi 0, %s273
      %s275 = sphi 0, %s273
      %s276 = sphi 0, %s275
      %s290 = sphi 0, %s276
      %s294 = sphi 0, %s294
      %s296 = sphi 0, %s294
      %s297 = sphi 0, %s296
      %s311 = sphi 0, %s297
      %s315 = sphi 0, %s315
      %s317 = sphi 0, %s315
      %s318 = sphi 0, %s317
      %s332 = sphi 0, %s318
      %s340 = sphi 0, %s342
      %s343 = sphi 0, %s340
      %s344 = sphi 0, %s343
      %s360 = sphi 0, %s344
      %s368 = sphi 0, %s370
      %s371 = sphi 0, %s368
      %s372 = sphi 0, %s371
      %s388 = sphi 0, %s372
      %s396 = sphi 0, %s398
      %s399 = sphi 0, %s396
      %s400 = sphi 0, %s399
      %s416 = sphi 0, %s400
    $region4: #{tpu_custom_call.1} parent=1 // loop_header_branch
      %43 = sbr.rel (%p41) target = $region8
    $region5: #{tpu_custom_call.1} parent=1 // loop_body
      %s45 = ssub.s32 %s40, 1
      %s46 = ssub.s32 %s40, 2
      %s53 = sadd.s32 1, %s48
      %p54 = scmp.ge.s32.totalorder %s53, 1
      %s55 = scalar_select %p54, 0, %s53
      %s56 = sadd.s32 1, %s47
      %s57 = scalar_select %p54, %s56, %s47
      %p58 = scmp.ge.s32.totalorder %s57, 2
      %s59 = scalar_select %p58, 0, %s57
      %s60 = ssub.s32 %s47, %s59
      %s61 = ssub.s32 %s48, %s55
      %s62 = sor.u32 %s60, %s61
      %p63 = scmp.eq.s32.totalorder %s62, 0
      %s65 = sadd.s32 %s64, 1
      %s66 = scalar_select %p63, %s64, %s65
      %p69 = pneg %p63
      %p70 = scmp.eq.s32.totalorder %s40, 1
      %p71 = por %p69, %p70
      %p72 = scmp.ne.s32.totalorder %s64, %s67
      %p73 = scmp.eq.s32.totalorder %s40, 0
      %p74 = por %p72, %p73
      %p75 = scmp.ne.s32.totalorder %s64, %s67
      %p76 = scmp.eq.s32.totalorder %s45, 1
      %p77 = por %p75, %p76
      %p78 = scmp.ne.s32.totalorder %s67, %s68
      %p79 = scmp.eq.s32.totalorder %s45, 0
      %p80 = por %p78, %p79
      %p81 = scmp.ne.s32.totalorder %s67, %s68
      %p82 = scmp.eq.s32.totalorder %s46, 1
      %p83 = por %p81, %p82
      %p85 = scmp.ne.s32.totalorder %s68, %s84
      %p86 = scmp.eq.s32.totalorder %s46, 0
      %p87 = por %p85, %p86
      %s88 = ssub.s32 %s47, %s59
      %p89 = scmp.eq.s32.totalorder %s88, 0
      %s91 = sadd.s32 %s90, 1
      %s92 = scalar_select %p89, %s90, %s91
      %p95 = pneg %p89
      %p96 = scmp.eq.s32.totalorder %s40, 1
      %p97 = por %p95, %p96
      %p98 = scmp.ne.s32.totalorder %s90, %s93
      %p99 = scmp.eq.s32.totalorder %s40, 0
      %p100 = por %p98, %p99
      %p101 = scmp.ne.s32.totalorder %s90, %s93
      %p102 = scmp.eq.s32.totalorder %s45, 1
      %p103 = por %p101, %p102
      %p104 = scmp.ne.s32.totalorder %s93, %s94
      %p105 = scmp.eq.s32.totalorder %s45, 0
      %p106 = por %p104, %p105
      %p107 = scmp.ne.s32.totalorder %s93, %s94
      %p108 = scmp.eq.s32.totalorder %s46, 1
      %p109 = por %p107, %p108
      %p111 = scmp.ne.s32.totalorder %s94, %s110
      %p112 = scmp.eq.s32.totalorder %s46, 0
      %p113 = por %p111, %p112
      %s114 = ssub.s32 %s47, %s59
      %p115 = scmp.eq.s32.totalorder %s114, 0
      %s117 = sadd.s32 %s116, 1
      %s118 = scalar_select %p115, %s116, %s117
      %p121 = pneg %p115
      %p122 = scmp.eq.s32.totalorder %s40, 1
      %p123 = por %p121, %p122
      %p124 = scmp.ne.s32.totalorder %s116, %s119
      %p125 = scmp.eq.s32.totalorder %s40, 0
      %p126 = por %p124, %p125
      %p127 = scmp.ne.s32.totalorder %s116, %s119
      %p128 = scmp.eq.s32.totalorder %s45, 1
      %p129 = por %p127, %p128
      %p130 = scmp.ne.s32.totalorder %s119, %s120
      %p131 = scmp.eq.s32.totalorder %s45, 0
      %p132 = por %p130, %p131
      %p133 = scmp.ne.s32.totalorder %s119, %s120
      %p134 = scmp.eq.s32.totalorder %s46, 1
      %p135 = por %p133, %p134
      %p137 = scmp.ne.s32.totalorder %s120, %s136
      %p138 = scmp.eq.s32.totalorder %s46, 0
      %p139 = por %p137, %p138
      %s140 = ssub.s32 %s47, %s59
      %s141 = ssub.s32 %s48, %s55
      %s142 = sor.u32 %s140, %s141
      %p143 = scmp.eq.s32.totalorder %s142, 0
      %s145 = sadd.s32 %s144, 1
      %s146 = scalar_select %p143, %s144, %s145
      %p149 = pneg %p143
      %p150 = scmp.eq.s32.totalorder %s40, 1
      %p151 = por %p149, %p150
      %p152 = scmp.ne.s32.totalorder %s144, %s147
      %p153 = scmp.eq.s32.totalorder %s40, 0
      %p154 = por %p152, %p153
      %p155 = scmp.ne.s32.totalorder %s144, %s147
      %p156 = scmp.eq.s32.totalorder %s45, 1
      %p157 = por %p155, %p156
      %p158 = scmp.ne.s32.totalorder %s147, %s148
      %p159 = scmp.eq.s32.totalorder %s45, 0
      %p160 = por %p158, %p159
      %p161 = scmp.ne.s32.totalorder %s147, %s148
      %p162 = scmp.eq.s32.totalorder %s46, 1
      %p163 = por %p161, %p162
      %p165 = scmp.ne.s32.totalorder %s148, %s164
      %p166 = scmp.eq.s32.totalorder %s46, 0
      %p167 = por %p165, %p166
      %s169 = sadd.s32 %s168, 1
      %p172 = scmp.eq.s32.totalorder %s40, 1
      %p173 = scmp.ne.s32.totalorder %s168, %s170
      %p174 = scmp.eq.s32.totalorder %s40, 0
      %p175 = por %p173, %p174
      %p176 = scmp.ne.s32.totalorder %s168, %s170
      %p177 = scmp.eq.s32.totalorder %s45, 1
      %p178 = por %p176, %p177
      %p179 = scmp.ne.s32.totalorder %s170, %s171
      %p180 = scmp.eq.s32.totalorder %s45, 0
      %p181 = por %p179, %p180
      %p182 = scmp.ne.s32.totalorder %s170, %s171
      %p183 = scmp.eq.s32.totalorder %s46, 1
      %p184 = por %p182, %p183
      %p186 = scmp.ne.s32.totalorder %s171, %s185
      %p187 = scmp.eq.s32.totalorder %s46, 0
      %p188 = por %p186, %p187
      %s190 = sadd.s32 %s189, 1
      %p193 = scmp.eq.s32.totalorder %s40, 1
      %p194 = scmp.ne.s32.totalorder %s189, %s191
      %p195 = scmp.eq.s32.totalorder %s40, 0
      %p196 = por %p194, %p195
      %p197 = scmp.ne.s32.totalorder %s189, %s191
      %p198 = scmp.eq.s32.totalorder %s45, 1
      %p199 = por %p197, %p198
      %p200 = scmp.ne.s32.totalorder %s191, %s192
      %p201 = scmp.eq.s32.totalorder %s45, 0
      %p202 = por %p200, %p201
      %p203 = scmp.ne.s32.totalorder %s191, %s192
      %p204 = scmp.eq.s32.totalorder %s46, 1
      %p205 = por %p203, %p204
      %p207 = scmp.ne.s32.totalorder %s192, %s206
      %p208 = scmp.eq.s32.totalorder %s46, 0
      %p209 = por %p207, %p208
      %s211 = sadd.s32 %s210, 1
      %p214 = scmp.eq.s32.totalorder %s40, 1
      %p215 = scmp.ne.s32.totalorder %s210, %s212
      %p216 = scmp.eq.s32.totalorder %s40, 0
      %p217 = por %p215, %p216
      %p218 = scmp.ne.s32.totalorder %s210, %s212
      %p219 = scmp.eq.s32.totalorder %s45, 1
      %p220 = por %p218, %p219
      %p221 = scmp.ne.s32.totalorder %s212, %s213
      %p222 = scmp.eq.s32.totalorder %s45, 0
      %p223 = por %p221, %p222
      %p224 = scmp.ne.s32.totalorder %s212, %s213
      %p225 = scmp.eq.s32.totalorder %s46, 1
      %p226 = por %p224, %p225
      %p228 = scmp.ne.s32.totalorder %s213, %s227
      %p229 = scmp.eq.s32.totalorder %s46, 0
      %p230 = por %p228, %p229
      %s232 = sadd.s32 %s231, 1
      %p235 = scmp.eq.s32.totalorder %s40, 1
      %p236 = scmp.ne.s32.totalorder %s231, %s233
      %p237 = scmp.eq.s32.totalorder %s40, 0
      %p238 = por %p236, %p237
      %p239 = scmp.ne.s32.totalorder %s231, %s233
      %p240 = scmp.eq.s32.totalorder %s45, 1
      %p241 = por %p239, %p240
      %p242 = scmp.ne.s32.totalorder %s233, %s234
      %p243 = scmp.eq.s32.totalorder %s45, 0
      %p244 = por %p242, %p243
      %p245 = scmp.ne.s32.totalorder %s233, %s234
      %p246 = scmp.eq.s32.totalorder %s46, 1
      %p247 = por %p245, %p246
      %p249 = scmp.ne.s32.totalorder %s234, %s248
      %p250 = scmp.eq.s32.totalorder %s46, 0
      %p251 = por %p249, %p250
      %s253 = sadd.s32 %s252, 1
      %p256 = scmp.eq.s32.totalorder %s40, 1
      %p257 = scmp.ne.s32.totalorder %s252, %s254
      %p258 = scmp.eq.s32.totalorder %s40, 0
      %p259 = por %p257, %p258
      %p260 = scmp.ne.s32.totalorder %s252, %s254
      %p261 = scmp.eq.s32.totalorder %s45, 1
      %p262 = por %p260, %p261
      %p263 = scmp.ne.s32.totalorder %s254, %s255
      %p264 = scmp.eq.s32.totalorder %s45, 0
      %p265 = por %p263, %p264
      %p266 = scmp.ne.s32.totalorder %s254, %s255
      %p267 = scmp.eq.s32.totalorder %s46, 1
      %p268 = por %p266, %p267
      %p270 = scmp.ne.s32.totalorder %s255, %s269
      %p271 = scmp.eq.s32.totalorder %s46, 0
      %p272 = por %p270, %p271
      %s274 = sadd.s32 %s273, 1
      %p277 = scmp.eq.s32.totalorder %s40, 1
      %p278 = scmp.ne.s32.totalorder %s273, %s275
      %p279 = scmp.eq.s32.totalorder %s40, 0
      %p280 = por %p278, %p279
      %p281 = scmp.ne.s32.totalorder %s273, %s275
      %p282 = scmp.eq.s32.totalorder %s45, 1
      %p283 = por %p281, %p282
      %p284 = scmp.ne.s32.totalorder %s275, %s276
      %p285 = scmp.eq.s32.totalorder %s45, 0
      %p286 = por %p284, %p285
      %p287 = scmp.ne.s32.totalorder %s275, %s276
      %p288 = scmp.eq.s32.totalorder %s46, 1
      %p289 = por %p287, %p288
      %p291 = scmp.ne.s32.totalorder %s276, %s290
      %p292 = scmp.eq.s32.totalorder %s46, 0
      %p293 = por %p291, %p292
      %s295 = sadd.s32 %s294, 1
      %p298 = scmp.eq.s32.totalorder %s40, 1
      %p299 = scmp.ne.s32.totalorder %s294, %s296
      %p300 = scmp.eq.s32.totalorder %s40, 0
      %p301 = por %p299, %p300
      %p302 = scmp.ne.s32.totalorder %s294, %s296
      %p303 = scmp.eq.s32.totalorder %s45, 1
      %p304 = por %p302, %p303
      %p305 = scmp.ne.s32.totalorder %s296, %s297
      %p306 = scmp.eq.s32.totalorder %s45, 0
      %p307 = por %p305, %p306
      %p308 = scmp.ne.s32.totalorder %s296, %s297
      %p309 = scmp.eq.s32.totalorder %s46, 1
      %p310 = por %p308, %p309
      %p312 = scmp.ne.s32.totalorder %s297, %s311
      %p313 = scmp.eq.s32.totalorder %s46, 0
      %p314 = por %p312, %p313
      %s316 = sadd.s32 %s315, 1
      %p319 = scmp.eq.s32.totalorder %s40, 1
      %p320 = scmp.ne.s32.totalorder %s315, %s317
      %p321 = scmp.eq.s32.totalorder %s40, 0
      %p322 = por %p320, %p321
      %p323 = scmp.ne.s32.totalorder %s315, %s317
      %p324 = scmp.eq.s32.totalorder %s45, 1
      %p325 = por %p323, %p324
      %p326 = scmp.ne.s32.totalorder %s317, %s318
      %p327 = scmp.eq.s32.totalorder %s45, 0
      %p328 = por %p326, %p327
      %p329 = scmp.ne.s32.totalorder %s317, %s318
      %p330 = scmp.eq.s32.totalorder %s46, 1
      %p331 = por %p329, %p330
      %p333 = scmp.ne.s32.totalorder %s318, %s332
      %p334 = scmp.eq.s32.totalorder %s46, 0
      %p335 = por %p333, %p334
      %s336 = ssub.s32 %s47, %s59
      %s337 = ssub.s32 %s48, %s55
      %s338 = sor.u32 %s336, %s337
      %p339 = scmp.eq.s32.totalorder %s338, 0
      %s341 = sadd.s32 %s340, 1
      %s342 = scalar_select %p339, %s340, %s341
      %p345 = pneg %p339
      %p346 = scmp.eq.s32.totalorder %s40, 1
      %p347 = por %p345, %p346
      %p348 = scmp.ne.s32.totalorder %s340, %s343
      %p349 = scmp.eq.s32.totalorder %s40, 0
      %p350 = por %p348, %p349
      %p351 = scmp.ne.s32.totalorder %s340, %s343
      %p352 = scmp.eq.s32.totalorder %s45, 1
      %p353 = por %p351, %p352
      %p354 = scmp.ne.s32.totalorder %s343, %s344
      %p355 = scmp.eq.s32.totalorder %s45, 0
      %p356 = por %p354, %p355
      %p357 = scmp.ne.s32.totalorder %s343, %s344
      %p358 = scmp.eq.s32.totalorder %s46, 1
      %p359 = por %p357, %p358
      %p361 = scmp.ne.s32.totalorder %s344, %s360
      %p362 = scmp.eq.s32.totalorder %s46, 0
      %p363 = por %p361, %p362
      %s364 = ssub.s32 %s47, %s59
      %s365 = ssub.s32 %s48, %s55
      %s366 = sor.u32 %s364, %s365
      %p367 = scmp.eq.s32.totalorder %s366, 0
      %s369 = sadd.s32 %s368, 1
      %s370 = scalar_select %p367, %s368, %s369
      %p373 = pneg %p367
      %p374 = scmp.eq.s32.totalorder %s40, 1
      %p375 = por %p373, %p374
      %p376 = scmp.ne.s32.totalorder %s368, %s371
      %p377 = scmp.eq.s32.totalorder %s40, 0
      %p378 = por %p376, %p377
      %p379 = scmp.ne.s32.totalorder %s368, %s371
      %p380 = scmp.eq.s32.totalorder %s45, 1
      %p381 = por %p379, %p380
      %p382 = scmp.ne.s32.totalorder %s371, %s372
      %p383 = scmp.eq.s32.totalorder %s45, 0
      %p384 = por %p382, %p383
      %p385 = scmp.ne.s32.totalorder %s371, %s372
      %p386 = scmp.eq.s32.totalorder %s46, 1
      %p387 = por %p385, %p386
      %p389 = scmp.ne.s32.totalorder %s372, %s388
      %p390 = scmp.eq.s32.totalorder %s46, 0
      %p391 = por %p389, %p390
      %s392 = ssub.s32 %s47, %s59
      %s393 = ssub.s32 %s48, %s55
      %s394 = sor.u32 %s392, %s393
      %p395 = scmp.eq.s32.totalorder %s394, 0
      %s397 = sadd.s32 %s396, 1
      %s398 = scalar_select %p395, %s396, %s397
      %p401 = pneg %p395
      %p402 = scmp.eq.s32.totalorder %s40, 1
      %p403 = por %p401, %p402
      %p404 = scmp.ne.s32.totalorder %s396, %s399
      %p405 = scmp.eq.s32.totalorder %s40, 0
      %p406 = por %p404, %p405
      %p407 = scmp.ne.s32.totalorder %s396, %s399
      %p408 = scmp.eq.s32.totalorder %s45, 1
      %p409 = por %p407, %p408
      %p410 = scmp.ne.s32.totalorder %s399, %s400
      %p411 = scmp.eq.s32.totalorder %s45, 0
      %p412 = por %p410, %p411
      %p413 = scmp.ne.s32.totalorder %s399, %s400
      %p414 = scmp.eq.s32.totalorder %s46, 1
      %p415 = por %p413, %p414
      %p417 = scmp.ne.s32.totalorder %s400, %s416
      %p418 = scmp.eq.s32.totalorder %s46, 0
      %p419 = por %p417, %p418
      %p420 = scmp.le.s32.totalorder 1, %s40
      %p421 = scmp.lt.s32.totalorder %s40, 3
      %p422 = pnand %p420, %p421
      %p423 = pneg %p422
      // Predicated region
      $region9: #{tpu_custom_call.1} parent=5 // pred_check
        _
      $region10: #{tpu_custom_call.1} parent=5 // pred_check_branch
        %425 = sbr.rel (%p422) target = $region12
      $region11: #{tpu_custom_call.1} parent=5 // pred_region
        %s426 = ssub.s32 %s40, 1
        // Predicated region
        $region13: #{tpu_custom_call.1} parent=11 // pred_check
          %p427 = pneg %p181
        $region14: #{tpu_custom_call.1} parent=11 // pred_check_branch
          %429 = sbr.rel (%p427) target = $region16
        $region15: #{tpu_custom_call.1} parent=11 // pred_region
          %s431 = ssub.s32 512, 512
          %432 = vsyncadd [#allocation9], %s431
          %s433 = sshll.u32 [#allocation10], 4
          %s434 = int_to_ptr.vmem [resolvable:$true] %s433
          %439 = dma.hbm_to_vmem [thread:$0]  %s4, 512, %s434, [#allocation9], 128, 128, 8
        $region16: #{tpu_custom_call.1} parent=11 // pred_fallthru
          _
        // Predicated region
        $region17: #{tpu_custom_call.1} parent=11 // pred_check
          %p440 = pneg %p202
        $region18: #{tpu_custom_call.1} parent=11 // pred_check_branch
          %442 = sbr.rel (%p440) target = $region20
        $region19: #{tpu_custom_call.1} parent=11 // pred_region
          %s444 = ssub.s32 512, 512
          %445 = vsyncadd [#allocation12], %s444
          %s446 = sshll.u32 [#allocation11], 4
          %s447 = int_to_ptr.vmem [resolvable:$true] %s446
          %452 = dma.hbm_to_vmem [thread:$0]  %s5, 512, %s447, [#allocation12], 128, 128, 8
        $region20: #{tpu_custom_call.1} parent=11 // pred_fallthru
          _
        // Predicated region
        $region21: #{tpu_custom_call.1} parent=11 // pred_check
          %p453 = pneg %p223
        $region22: #{tpu_custom_call.1} parent=11 // pred_check_branch
          %455 = sbr.rel (%p453) target = $region24
        $region23: #{tpu_custom_call.1} parent=11 // pred_region
          %s457 = ssub.s32 512, 512
          %458 = vsyncadd [#allocation12], %s457
          %s459 = sshll.u32 [#allocation13], 4
          %s460 = int_to_ptr.vmem [resolvable:$true] %s459
          %465 = dma.hbm_to_vmem [thread:$0]  %s6, 512, %s460, [#allocation12], 128, 128, 8
        $region24: #{tpu_custom_call.1} parent=11 // pred_fallthru
          _
        // Predicated region
        $region25: #{tpu_custom_call.1} parent=11 // pred_check
          %p466 = pneg %p244
        $region26: #{tpu_custom_call.1} parent=11 // pred_check_branch
          %468 = sbr.rel (%p466) target = $region28
        $region27: #{tpu_custom_call.1} parent=11 // pred_region
          %s470 = ssub.s32 16, 16
          %471 = vsyncadd [#allocation15], %s470
          %s473 = sshll.u32 [#allocation14], 4
          %s474 = int_to_ptr.vmem [resolvable:$true] %s473
          %476 = dma.hbm_to_vmem [thread:$0]  %s7, 16, %s474, [#allocation15]
        $region28: #{tpu_custom_call.1} parent=11 // pred_fallthru
          _
        // Predicated region
        $region29: #{tpu_custom_call.1} parent=11 // pred_check
          %p477 = pneg %p265
        $region30: #{tpu_custom_call.1} parent=11 // pred_check_branch
          %479 = sbr.rel (%p477) target = $region32
        $region31: #{tpu_custom_call.1} parent=11 // pred_region
          %s481 = ssub.s32 16, 16
          %482 = vsyncadd [#allocation15], %s481
          %s484 = sshll.u32 [#allocation16], 4
          %s485 = int_to_ptr.vmem [resolvable:$true] %s484
          %487 = dma.hbm_to_vmem [thread:$0]  %s8, 16, %s485, [#allocation15]
        $region32: #{tpu_custom_call.1} parent=11 // pred_fallthru
          _
        // Predicated region
        $region33: #{tpu_custom_call.1} parent=11 // pred_check
          %p488 = pneg %p286
        $region34: #{tpu_custom_call.1} parent=11 // pred_check_branch
          %490 = sbr.rel (%p488) target = $region36
        $region35: #{tpu_custom_call.1} parent=11 // pred_region
          %s492 = ssub.s32 16, 16
          %493 = vsyncadd [#allocation18], %s492
          %s495 = sshll.u32 [#allocation17], 4
          %s496 = int_to_ptr.vmem [resolvable:$true] %s495
          %498 = dma.hbm_to_vmem [thread:$0]  %s9, 16, %s496, [#allocation18]
        $region36: #{tpu_custom_call.1} parent=11 // pred_fallthru
          _
        // Predicated region
        $region37: #{tpu_custom_call.1} parent=11 // pred_check
          %p499 = pneg %p307
        $region38: #{tpu_custom_call.1} parent=11 // pred_check_branch
          %501 = sbr.rel (%p499) target = $region40
        $region39: #{tpu_custom_call.1} parent=11 // pred_region
          %s503 = ssub.s32 512, 512
          %504 = vsyncadd [#allocation18], %s503
          %s505 = sshll.u32 [#allocation19], 4
          %s506 = int_to_ptr.vmem [resolvable:$true] %s505
          %511 = dma.hbm_to_vmem [thread:$0]  %s10, 512, %s506, [#allocation18], 128, 128, 8
        $region40: #{tpu_custom_call.1} parent=11 // pred_fallthru
          _
        // Predicated region
        $region41: #{tpu_custom_call.1} parent=11 // pred_check
          %p512 = pneg %p328
        $region42: #{tpu_custom_call.1} parent=11 // pred_check_branch
          %514 = sbr.rel (%p512) target = $region44
        $region43: #{tpu_custom_call.1} parent=11 // pred_region
          %s516 = ssub.s32 16, 16
          %517 = vsyncadd [#allocation21], %s516
          %s519 = sshll.u32 [#allocation20], 4
          %s520 = int_to_ptr.vmem [resolvable:$true] %s519
          %522 = dma.hbm_to_vmem [thread:$0]  %s11, 16, %s520, [#allocation21]
        $region44: #{tpu_custom_call.1} parent=11 // pred_fallthru
          _
      $region12: #{tpu_custom_call.1} parent=5 // pred_fallthru
        _
      %p523 = scmp.lt.s32.totalorder %s40, 2
      // Predicated region
      $region45: #{tpu_custom_call.1} parent=5 // pred_check
        %p524 = pneg %p523
      $region46: #{tpu_custom_call.1} parent=5 // pred_check_branch
        %526 = sbr.rel (%p524) target = $region48
      $region47: #{tpu_custom_call.1} parent=5 // pred_region
        // Predicated region
        $region49: #{tpu_custom_call.1} parent=47 // pred_check
          %p527 = pneg %p74
        $region50: #{tpu_custom_call.1} parent=47 // pred_check_branch
          %529 = sbr.rel (%p527) target = $region52
        $region51: #{tpu_custom_call.1} parent=47 // pred_region
          %s530 = sand.u32 %s64, 1
          %s531 = scalar_lea.sflag [#allocation3], %s530
          %s532 = sand.u32 %s64, 1
          %s533 = smul.addr %s532, 8
          %s534 = scalar_lea.vmem [#allocation2], %s533
          %s536 = ssub.s32 128, 128
          %537 = vsyncadd %s531, %s536
          %s538 = sadd.s32 %s48, %s47
          %s539 = smul.addr %s538, 128
          %s540 = scalar_lea.hbm %s0, %s539
          %s542 = sshll.u32 %s534, 4
          %s543 = int_to_ptr.vmem [resolvable:$true] %s542
          %545 = dma.hbm_to_vmem [thread:$0]  %s540, 128, %s543, %s531
        $region52: #{tpu_custom_call.1} parent=47 // pred_fallthru
          _
        // Predicated region
        $region53: #{tpu_custom_call.1} parent=47 // pred_check
          %p546 = pneg %p100
        $region54: #{tpu_custom_call.1} parent=47 // pred_check_branch
          %548 = sbr.rel (%p546) target = $region56
        $region55: #{tpu_custom_call.1} parent=47 // pred_region
          %s549 = sand.u32 %s40, 1
          %s550 = scalar_lea.sflag [#allocation6], %s549
          %s551 = sand.u32 %s90, 1
          %s552 = smul.addr %s551, 16
          %s553 = scalar_lea.vmem [#allocation5], %s552
          %s555 = ssub.s32 256, 256
          %556 = vsyncadd %s550, %s555
          %s557 = smul.addr %s47, 2
          %s558 = smul.addr %s557, 128
          %s559 = scalar_lea.hbm %s1, %s558
          %s560 = sshll.u32 %s553, 4
          %s561 = int_to_ptr.vmem [resolvable:$true] %s560
          %566 = dma.hbm_to_vmem [thread:$0]  %s559, 256, %s561, %s550, 128, 128, 8
        $region56: #{tpu_custom_call.1} parent=47 // pred_fallthru
          _
        // Predicated region
        $region57: #{tpu_custom_call.1} parent=47 // pred_check
          %p567 = pneg %p126
        $region58: #{tpu_custom_call.1} parent=47 // pred_check_branch
          %569 = sbr.rel (%p567) target = $region60
        $region59: #{tpu_custom_call.1} parent=47 // pred_region
          %s570 = sand.u32 %s40, 1
          %s571 = scalar_lea.sflag [#allocation6], %s570
          %s572 = sand.u32 %s116, 1
          %s573 = smul.addr %s572, 16
          %s574 = scalar_lea.vmem [#allocation7], %s573
          %s576 = ssub.s32 256, 256
          %577 = vsyncadd %s571, %s576
          %s578 = smul.addr %s47, 2
          %s579 = smul.addr %s578, 128
          %s580 = scalar_lea.hbm %s2, %s579
          %s581 = sshll.u32 %s574, 4
          %s582 = int_to_ptr.vmem [resolvable:$true] %s581
          %587 = dma.hbm_to_vmem [thread:$0]  %s580, 256, %s582, %s571, 128, 128, 8
        $region60: #{tpu_custom_call.1} parent=47 // pred_fallthru
          _
        // Predicated region
        $region61: #{tpu_custom_call.1} parent=47 // pred_check
          %p588 = pneg %p154
        $region62: #{tpu_custom_call.1} parent=47 // pred_check_branch
          %590 = sbr.rel (%p588) target = $region64
        $region63: #{tpu_custom_call.1} parent=47 // pred_region
          %s591 = sand.u32 %s40, 1
          %s592 = scalar_lea.sflag [#allocation9], %s591
          %s593 = sand.u32 %s144, 1
          %s594 = smul.addr %s593, 8
          %s595 = scalar_lea.vmem [#allocation8], %s594
          %s597 = ssub.s32 128, 128
          %598 = vsyncadd %s592, %s597
          %s599 = sadd.s32 %s48, %s47
          %s600 = smul.addr %s599, 128
          %s601 = scalar_lea.hbm %s3, %s600
          %s603 = sshll.u32 %s595, 4
          %s604 = int_to_ptr.vmem [resolvable:$true] %s603
          %606 = dma.hbm_to_vmem [thread:$0]  %s601, 128, %s604, %s592
        $region64: #{tpu_custom_call.1} parent=47 // pred_fallthru
          _
      $region48: #{tpu_custom_call.1} parent=5 // pred_fallthru
        _
      %p607 = scmp.le.s32.totalorder 1, %s40
      %p608 = scmp.lt.s32.totalorder %s40, 3
      %p609 = pnand %p607, %p608
      %p610 = pneg %p609
      // Predicated region
      $region65: #{tpu_custom_call.1} parent=5 // pred_check
        _
      $region66: #{tpu_custom_call.1} parent=5 // pred_check_branch
        %612 = sbr.rel (%p609) target = $region68
      $region67: #{tpu_custom_call.1} parent=5 // pred_region
        %s613 = ssub.s32 %s40, 1
        %s614 = sand.u32 %s67, 1
        %s615 = scalar_lea.sflag [#allocation3], %s614
        %s616 = sand.u32 %s67, 1
        %s617 = smul.addr %s616, 8
        %s618 = scalar_lea.vmem [#allocation2], %s617
        // Predicated region
        $region69: #{tpu_custom_call.1} parent=67 // pred_check
          %p619 = pneg %p80
        $region70: #{tpu_custom_call.1} parent=67 // pred_check_branch
          %621 = sbr.rel (%p619) target = $region72
        $region71: #{tpu_custom_call.1} parent=67 // pred_region
          %622 = dma.done %s615, 128
        $region72: #{tpu_custom_call.1} parent=67 // pred_fallthru
          _
        %s623 = sand.u32 %s45, 1
        %s624 = scalar_lea.sflag [#allocation6], %s623
        %s625 = sand.u32 %s93, 1
        %s626 = smul.addr %s625, 16
        %s627 = scalar_lea.vmem [#allocation5], %s626
        // Predicated region
        $region73: #{tpu_custom_call.1} parent=67 // pred_check
          %p628 = pneg %p106
        $region74: #{tpu_custom_call.1} parent=67 // pred_check_branch
          %630 = sbr.rel (%p628) target = $region76
        $region75: #{tpu_custom_call.1} parent=67 // pred_region
          %631 = dma.done %s624, 256
        $region76: #{tpu_custom_call.1} parent=67 // pred_fallthru
          _
        %s632 = sand.u32 %s45, 1
        %s633 = scalar_lea.sflag [#allocation6], %s632
        %s634 = sand.u32 %s119, 1
        %s635 = smul.addr %s634, 16
        %s636 = scalar_lea.vmem [#allocation7], %s635
        // Predicated region
        $region77: #{tpu_custom_call.1} parent=67 // pred_check
          %p637 = pneg %p132
        $region78: #{tpu_custom_call.1} parent=67 // pred_check_branch
          %639 = sbr.rel (%p637) target = $region80
        $region79: #{tpu_custom_call.1} parent=67 // pred_region
          %640 = dma.done %s633, 256
        $region80: #{tpu_custom_call.1} parent=67 // pred_fallthru
          _
        %s641 = sand.u32 %s45, 1
        %s642 = scalar_lea.sflag [#allocation9], %s641
        %s643 = sand.u32 %s147, 1
        %s644 = smul.addr %s643, 8
        %s645 = scalar_lea.vmem [#allocation8], %s644
        // Predicated region
        $region81: #{tpu_custom_call.1} parent=67 // pred_check
          %p646 = pneg %p160
        $region82: #{tpu_custom_call.1} parent=67 // pred_check_branch
          %648 = sbr.rel (%p646) target = $region84
        $region83: #{tpu_custom_call.1} parent=67 // pred_region
          %649 = dma.done %s642, 128
        $region84: #{tpu_custom_call.1} parent=67 // pred_fallthru
          _
        // Predicated region
        $region85: #{tpu_custom_call.1} parent=67 // pred_check
          %p650 = pneg %p181
        $region86: #{tpu_custom_call.1} parent=67 // pred_check_branch
          %652 = sbr.rel (%p650) target = $region88
        $region87: #{tpu_custom_call.1} parent=67 // pred_region
          %653 = dma.done [#allocation9], 512
        $region88: #{tpu_custom_call.1} parent=67 // pred_fallthru
          _
        // Predicated region
        $region89: #{tpu_custom_call.1} parent=67 // pred_check
          %p654 = pneg %p202
        $region90: #{tpu_custom_call.1} parent=67 // pred_check_branch
          %656 = sbr.rel (%p654) target = $region92
        $region91: #{tpu_custom_call.1} parent=67 // pred_region
          %657 = dma.done [#allocation12], 512
        $region92: #{tpu_custom_call.1} parent=67 // pred_fallthru
          _
        // Predicated region
        $region93: #{tpu_custom_call.1} parent=67 // pred_check
          %p658 = pneg %p223
        $region94: #{tpu_custom_call.1} parent=67 // pred_check_branch
          %660 = sbr.rel (%p658) target = $region96
        $region95: #{tpu_custom_call.1} parent=67 // pred_region
          %661 = dma.done [#allocation12], 512
        $region96: #{tpu_custom_call.1} parent=67 // pred_fallthru
          _
        // Predicated region
        $region97: #{tpu_custom_call.1} parent=67 // pred_check
          %p662 = pneg %p244
        $region98: #{tpu_custom_call.1} parent=67 // pred_check_branch
          %664 = sbr.rel (%p662) target = $region100
        $region99: #{tpu_custom_call.1} parent=67 // pred_region
          %665 = dma.done [#allocation15], 16
        $region100: #{tpu_custom_call.1} parent=67 // pred_fallthru
          _
        // Predicated region
        $region101: #{tpu_custom_call.1} parent=67 // pred_check
          %p666 = pneg %p265
        $region102: #{tpu_custom_call.1} parent=67 // pred_check_branch
          %668 = sbr.rel (%p666) target = $region104
        $region103: #{tpu_custom_call.1} parent=67 // pred_region
          %669 = dma.done [#allocation15], 16
        $region104: #{tpu_custom_call.1} parent=67 // pred_fallthru
          _
        // Predicated region
        $region105: #{tpu_custom_call.1} parent=67 // pred_check
          %p670 = pneg %p286
        $region106: #{tpu_custom_call.1} parent=67 // pred_check_branch
          %672 = sbr.rel (%p670) target = $region108
        $region107: #{tpu_custom_call.1} parent=67 // pred_region
          %673 = dma.done [#allocation18], 16
        $region108: #{tpu_custom_call.1} parent=67 // pred_fallthru
          _
        // Predicated region
        $region109: #{tpu_custom_call.1} parent=67 // pred_check
          %p674 = pneg %p307
        $region110: #{tpu_custom_call.1} parent=67 // pred_check_branch
          %676 = sbr.rel (%p674) target = $region112
        $region111: #{tpu_custom_call.1} parent=67 // pred_region
          %677 = dma.done [#allocation18], 512
        $region112: #{tpu_custom_call.1} parent=67 // pred_fallthru
          _
        // Predicated region
        $region113: #{tpu_custom_call.1} parent=67 // pred_check
          %p678 = pneg %p328
        $region114: #{tpu_custom_call.1} parent=67 // pred_check_branch
          %680 = sbr.rel (%p678) target = $region116
        $region115: #{tpu_custom_call.1} parent=67 // pred_region
          %681 = dma.done [#allocation21], 16
        $region116: #{tpu_custom_call.1} parent=67 // pred_fallthru
          _
        %s682 = sand.u32 %s67, 1
        %s683 = scalar_lea.sflag [#allocation3], %s682
        %s684 = sand.u32 %s67, 1
        %s685 = smul.addr %s684, 8
        %s686 = scalar_lea.vmem [#allocation2], %s685
        %p687 = pneg %p80
        %p688 = pneg %p77
        %s689 = sand.u32 %s45, 1
        %s690 = scalar_lea.sflag [#allocation6], %s689
        %s691 = sand.u32 %s93, 1
        %s692 = smul.addr %s691, 16
        %s693 = scalar_lea.vmem [#allocation5], %s692
        %p694 = pneg %p106
        %p695 = pneg %p103
        %s696 = sand.u32 %s45, 1
        %s697 = scalar_lea.sflag [#allocation6], %s696
        %s698 = sand.u32 %s119, 1
        %s699 = smul.addr %s698, 16
        %s700 = scalar_lea.vmem [#allocation7], %s699
        %p701 = pneg %p132
        %p702 = pneg %p129
        %s703 = sand.u32 %s45, 1
        %s704 = scalar_lea.sflag [#allocation9], %s703
        %s705 = sand.u32 %s147, 1
        %s706 = smul.addr %s705, 8
        %s707 = scalar_lea.vmem [#allocation8], %s706
        %p708 = pneg %p160
        %p709 = pneg %p157
        %p710 = pneg %p181
        %p711 = pneg %p178
        %p712 = pneg %p202
        %p713 = pneg %p199
        %p714 = pneg %p223
        %p715 = pneg %p220
        %p716 = pneg %p244
        %p717 = pneg %p241
        %p718 = pneg %p265
        %p719 = pneg %p262
        %p720 = pneg %p286
        %p721 = pneg %p283
        %p722 = pneg %p307
        %p723 = pneg %p304
        %p724 = pneg %p328
        %p725 = pneg %p325
        %p726 = pneg %p356
        %p727 = pneg %p353
        %s728 = sand.u32 %s343, 1
        %s729 = scalar_lea.sflag [#allocation4], %s728
        %s730 = sand.u32 %s343, 1
        %s731 = smul.addr %s730, 8
        %s732 = scalar_lea.vmem [#allocation22], %s731
        %p733 = pneg %p384
        %p734 = pneg %p381
        %s735 = sand.u32 %s45, 1
        %s736 = scalar_lea.sflag [#allocation24], %s735
        %s737 = sand.u32 %s371, 1
        %s738 = smul.addr %s737, 32
        %s739 = scalar_lea.vmem [#allocation23], %s738
        %p740 = pneg %p412
        %p741 = pneg %p409
        %s742 = sand.u32 %s45, 1
        %s743 = scalar_lea.sflag [#allocation24], %s742
        %s744 = sand.u32 %s399, 1
        %s745 = smul.addr %s744, 8
        %s746 = scalar_lea.vmem [#allocation25], %s745
        %v747 = vld [vmem:[%s618] sm:$0xff]
        %v748 = vld [vmem:[%s627] sm:$0xff]
        %v749 = vld [vmem:[%s627 + $0x8] sm:$0xff]
        %v750 = vld [vmem:[%s636] sm:$0xff]
        %v751 = vld [vmem:[%s636 + $0x8] sm:$0xff]
        %v752 = vld [vmem:[%s645] sm:$0xff]
        %v753 = vld [vmem:[#allocation10] sm:$0xff]
        %v754 = vld [vmem:[#allocation10 + $0x8] sm:$0xff]
        %v755 = vld [vmem:[#allocation10 + $0x10] sm:$0xff]
        %v756 = vld [vmem:[#allocation10 + $0x18] sm:$0xff]
        %v757 = vld [vmem:[#allocation14] sm:$0x1]
        %v759 = vlaneseq
        %v760 = vshrl.u32 %v759, 7
        %v761 = vsub.s32 0, %v760
        %v762 = vrot.slane %v757, %v761
        %vm764 = vcmask 261120
        %v766 = vsel %vm764, %v747, 0
        %v769 = vsel %vm764, %v753, 0
        %v772 = vsel %vm764, %v754, 0
        %v775 = vsel %vm764, %v755, 0
        %v778 = vsel %vm764, %v756, 0
        %780 = vmatprep.subr.mxu0 0.0
        %781 = vmatpush1.xpose.msra.mxu0 %v769
        %782 = vmatprep.subr.mxu0 0.0
        %783 = vmatpush1.xpose.msra.mxu0 %v772
        %784 = vmatprep.subr.mxu0 0.0
        %785 = vmatpush1.xpose.msra.mxu0 %v775
        %786 = vmatprep.subr.mxu0 0.0
        %787 = vmatpush1.xpose.msra.mxu0 %v778
        %788 = vmatprep.subr.mxu0 0.0
        %789 = vmatpush1.xpose.msra.mxu0 0.0
        %790 = vmatprep.subr.mxu0 0.0
        %791 = vmatpush1.xpose.msra.mxu0 0.0
        %792 = vmatprep.subr.mxu0 0.0
        %793 = vmatpush1.xpose.msra.mxu0 0.0
        %794 = vmatprep.subr.mxu0 0.0
        %795 = vmatpush1.xpose.msra.mxu0 0.0
        %796 = vmatprep.subr.mxu0 0.0
        %797 = vmatpush1.xpose.msra.mxu0 0.0
        %798 = vmatprep.subr.mxu0 0.0
        %799 = vmatpush1.xpose.msra.mxu0 0.0
        %800 = vmatprep.subr.mxu0 0.0
        %801 = vmatpush1.xpose.msra.mxu0 0.0
        %802 = vmatprep.subr.mxu0 0.0
        %803 = vmatpush1.xpose.msra.mxu0 0.0
        %804 = vmatprep.subr.mxu0 0.0
        %805 = vmatpush1.xpose.msra.mxu0 0.0
        %806 = vmatprep.subr.mxu0 0.0
        %807 = vmatpush1.xpose.msra.mxu0 0.0
        %808 = vmatprep.subr.mxu0 0.0
        %809 = vmatpush1.xpose.msra.mxu0 0.0
        %810 = vmatprep.subr.mxu0 0.0
        %811 = vmatpush1.xpose.msra.mxu0 0.0
        %812 = vmatprep.subr.mxu0 0.0
        %813 = vmatpush1.xpose.msra.mxu0 0.0
        %814 = vmatprep.subr.mxu0 0.0
        %815 = vmatpush1.xpose.msra.mxu0 0.0
        %816 = vmatprep.subr.mxu0 0.0
        %817 = vmatpush1.xpose.msra.mxu0 0.0
        %818 = vmatprep.subr.mxu0 0.0
        %819 = vmatpush1.xpose.msra.mxu0 0.0
        %820 = vmatprep.subr.mxu0 0.0
        %821 = vmatpush1.xpose.msra.mxu0 0.0
        %822 = vmatprep.subr.mxu0 0.0
        %823 = vmatpush1.xpose.msra.mxu0 0.0
        %824 = vmatprep.subr.mxu0 0.0
        %825 = vmatpush1.xpose.msra.mxu0 0.0
        %826 = vmatprep.subr.mxu0 0.0
        %827 = vmatpush1.xpose.msra.mxu0 0.0
        %828 = vmatprep.subr.mxu0 0.0
        %829 = vmatpush1.xpose.msra.mxu0 0.0
        %830 = vmatprep.subr.mxu0 0.0
        %831 = vmatpush1.xpose.msra.mxu0 0.0
        %832 = vmatprep.subr.mxu0 0.0
        %833 = vmatpush1.xpose.msra.mxu0 0.0
        %834 = vmatprep.subr.mxu0 0.0
        %835 = vmatpush1.xpose.msra.mxu0 0.0
        %836 = vmatprep.subr.mxu0 0.0
        %837 = vmatpush1.xpose.msra.mxu0 0.0
        %838 = vmatprep.subr.mxu0 0.0
        %839 = vmatpush1.xpose.msra.mxu0 0.0
        %840 = vmatprep.subr.mxu0 0.0
        %841 = vmatpush1.xpose.msra.mxu0 0.0
        %842 = vmatprep.subr.mxu0 0.0
        %843 = vmatpush1.xpose.msra.mxu0 0.0
        %844 = vmatprep.mubr.f32.mxu0 0.0
        %845 = vmatmul.mubr.f32.gmra.mrb[0].mxu0 %v766
        %v846 = vpop.f32.mrb[0].mxu0
        %v847 = vadd.f32 %v762, %v846
        %v848 = vpop.f32.mrb[0].mxu0
        %849 = vdwg.mxu0
        %v850 = vld [vmem:[#allocation11] sm:$0xff]
        %v851 = vld [vmem:[#allocation11 + $0x8] sm:$0xff]
        %v852 = vld [vmem:[#allocation11 + $0x10] sm:$0xff]
        %v853 = vld [vmem:[#allocation11 + $0x18] sm:$0xff]
        %v854 = vld [vmem:[#allocation16] sm:$0x1]
        %v856 = vlaneseq
        %v857 = vshrl.u32 %v856, 7
        %v858 = vsub.s32 0, %v857
        %v859 = vrot.slane %v854, %v858
        %v862 = vsel %vm764, %v748, 0
        %v865 = vsel %vm764, %v749, 0
        %v868 = vsel %vm764, %v850, 0
        %v871 = vsel %vm764, %v851, 0
        %v874 = vsel %vm764, %v852, 0
        %v877 = vsel %vm764, %v853, 0
        %879 = vmatprep.subr.mxu0 0.0
        %880 = vmatpush1.xpose.msra.mxu0 %v868
        %881 = vmatprep.subr.mxu0 0.0
        %882 = vmatpush1.xpose.msra.mxu0 %v871
        %883 = vmatprep.subr.mxu0 0.0
        %884 = vmatpush1.xpose.msra.mxu0 %v874
        %885 = vmatprep.subr.mxu0 0.0
        %886 = vmatpush1.xpose.msra.mxu0 %v877
        %887 = vmatprep.subr.mxu0 0.0
        %888 = vmatpush1.xpose.msra.mxu0 0.0
        %889 = vmatprep.subr.mxu0 0.0
        %890 = vmatpush1.xpose.msra.mxu0 0.0
        %891 = vmatprep.subr.mxu0 0.0
        %892 = vmatpush1.xpose.msra.mxu0 0.0
        %893 = vmatprep.subr.mxu0 0.0
        %894 = vmatpush1.xpose.msra.mxu0 0.0
        %895 = vmatprep.subr.mxu0 0.0
        %896 = vmatpush1.xpose.msra.mxu0 0.0
        %897 = vmatprep.subr.mxu0 0.0
        %898 = vmatpush1.xpose.msra.mxu0 0.0
        %899 = vmatprep.subr.mxu0 0.0
        %900 = vmatpush1.xpose.msra.mxu0 0.0
        %901 = vmatprep.subr.mxu0 0.0
        %902 = vmatpush1.xpose.msra.mxu0 0.0
        %903 = vmatprep.subr.mxu0 0.0
        %904 = vmatpush1.xpose.msra.mxu0 0.0
        %905 = vmatprep.subr.mxu0 0.0
        %906 = vmatpush1.xpose.msra.mxu0 0.0
        %907 = vmatprep.subr.mxu0 0.0
        %908 = vmatpush1.xpose.msra.mxu0 0.0
        %909 = vmatprep.subr.mxu0 0.0
        %910 = vmatpush1.xpose.msra.mxu0 0.0
        %911 = vmatprep.subr.mxu0 0.0
        %912 = vmatpush1.xpose.msra.mxu0 0.0
        %913 = vmatprep.subr.mxu0 0.0
        %914 = vmatpush1.xpose.msra.mxu0 0.0
        %915 = vmatprep.subr.mxu0 0.0
        %916 = vmatpush1.xpose.msra.mxu0 0.0
        %917 = vmatprep.subr.mxu0 0.0
        %918 = vmatpush1.xpose.msra.mxu0 0.0
        %919 = vmatprep.subr.mxu0 0.0
        %920 = vmatpush1.xpose.msra.mxu0 0.0
        %921 = vmatprep.subr.mxu0 0.0
        %922 = vmatpush1.xpose.msra.mxu0 0.0
        %923 = vmatprep.subr.mxu0 0.0
        %924 = vmatpush1.xpose.msra.mxu0 0.0
        %925 = vmatprep.subr.mxu0 0.0
        %926 = vmatpush1.xpose.msra.mxu0 0.0
        %927 = vmatprep.subr.mxu0 0.0
        %928 = vmatpush1.xpose.msra.mxu0 0.0
        %929 = vmatprep.subr.mxu0 0.0
        %930 = vmatpush1.xpose.msra.mxu0 0.0
        %931 = vmatprep.subr.mxu0 0.0
        %932 = vmatpush1.xpose.msra.mxu0 0.0
        %933 = vmatprep.subr.mxu0 0.0
        %934 = vmatpush1.xpose.msra.mxu0 0.0
        %935 = vmatprep.subr.mxu0 0.0
        %936 = vmatpush1.xpose.msra.mxu0 0.0
        %937 = vmatprep.subr.mxu0 0.0
        %938 = vmatpush1.xpose.msra.mxu0 0.0
        %939 = vmatprep.subr.mxu0 0.0
        %940 = vmatpush1.xpose.msra.mxu0 0.0
        %941 = vmatprep.subr.mxu0 0.0
        %942 = vmatpush1.xpose.msra.mxu0 0.0
        %943 = vmatprep.mubr.f32.mxu0 0.0
        %944 = vmatmul.mubr.f32.gmra.mrb[0].mxu0 %v862
        %v945 = vpop.f32.mrb[0].mxu0
        %v946 = vadd.f32 %v859, %v945
        %v947 = vpop.f32.mrb[0].mxu0
        %948 = vmatprep.mubr.f32.mxu0 0.0
        %949 = vmatmul.mubr.f32.gmra.mrb[0].mxu0 %v865
        %v950 = vpop.f32.mrb[0].mxu0
        %v951 = vadd.f32 %v859, %v950
        %v952 = vpop.f32.mrb[0].mxu0
        %953 = vdwg.mxu0
        %v954 = vld [vmem:[#allocation13] sm:$0xff]
        %v955 = vld [vmem:[#allocation13 + $0x8] sm:$0xff]
        %v956 = vld [vmem:[#allocation13 + $0x10] sm:$0xff]
        %v957 = vld [vmem:[#allocation13 + $0x18] sm:$0xff]
        %v958 = vld [vmem:[#allocation17] sm:$0x1]
        %v960 = vlaneseq
        %v961 = vshrl.u32 %v960, 7
        %v962 = vsub.s32 0, %v961
        %v963 = vrot.slane %v958, %v962
        %v966 = vsel %vm764, %v750, 0
        %v969 = vsel %vm764, %v751, 0
        %v972 = vsel %vm764, %v954, 0
        %v975 = vsel %vm764, %v955, 0
        %v978 = vsel %vm764, %v956, 0
        %v981 = vsel %vm764, %v957, 0
        %983 = vmatprep.subr.mxu0 0.0
        %984 = vmatpush1.xpose.msra.mxu0 %v972
        %985 = vmatprep.subr.mxu0 0.0
        %986 = vmatpush1.xpose.msra.mxu0 %v975
        %987 = vmatprep.subr.mxu0 0.0
        %988 = vmatpush1.xpose.msra.mxu0 %v978
        %989 = vmatprep.subr.mxu0 0.0
        %990 = vmatpush1.xpose.msra.mxu0 %v981
        %991 = vmatprep.subr.mxu0 0.0
        %992 = vmatpush1.xpose.msra.mxu0 0.0
        %993 = vmatprep.subr.mxu0 0.0
        %994 = vmatpush1.xpose.msra.mxu0 0.0
        %995 = vmatprep.subr.mxu0 0.0
        %996 = vmatpush1.xpose.msra.mxu0 0.0
        %997 = vmatprep.subr.mxu0 0.0
        %998 = vmatpush1.xpose.msra.mxu0 0.0
        %999 = vmatprep.subr.mxu0 0.0
        %1000 = vmatpush1.xpose.msra.mxu0 0.0
        %1001 = vmatprep.subr.mxu0 0.0
        %1002 = vmatpush1.xpose.msra.mxu0 0.0
        %1003 = vmatprep.subr.mxu0 0.0
        %1004 = vmatpush1.xpose.msra.mxu0 0.0
        %1005 = vmatprep.subr.mxu0 0.0
        %1006 = vmatpush1.xpose.msra.mxu0 0.0
        %1007 = vmatprep.subr.mxu0 0.0
        %1008 = vmatpush1.xpose.msra.mxu0 0.0
        %1009 = vmatprep.subr.mxu0 0.0
        %1010 = vmatpush1.xpose.msra.mxu0 0.0
        %1011 = vmatprep.subr.mxu0 0.0
        %1012 = vmatpush1.xpose.msra.mxu0 0.0
        %1013 = vmatprep.subr.mxu0 0.0
        %1014 = vmatpush1.xpose.msra.mxu0 0.0
        %1015 = vmatprep.subr.mxu0 0.0
        %1016 = vmatpush1.xpose.msra.mxu0 0.0
        %1017 = vmatprep.subr.mxu0 0.0
        %1018 = vmatpush1.xpose.msra.mxu0 0.0
        %1019 = vmatprep.subr.mxu0 0.0
        %1020 = vmatpush1.xpose.msra.mxu0 0.0
        %1021 = vmatprep.subr.mxu0 0.0
        %1022 = vmatpush1.xpose.msra.mxu0 0.0
        %1023 = vmatprep.subr.mxu0 0.0
        %1024 = vmatpush1.xpose.msra.mxu0 0.0
        %1025 = vmatprep.subr.mxu0 0.0
        %1026 = vmatpush1.xpose.msra.mxu0 0.0
        %1027 = vmatprep.subr.mxu0 0.0
        %1028 = vmatpush1.xpose.msra.mxu0 0.0
        %1029 = vmatprep.subr.mxu0 0.0
        %1030 = vmatpush1.xpose.msra.mxu0 0.0
        %1031 = vmatprep.subr.mxu0 0.0
        %1032 = vmatpush1.xpose.msra.mxu0 0.0
        %1033 = vmatprep.subr.mxu0 0.0
        %1034 = vmatpush1.xpose.msra.mxu0 0.0
        %1035 = vmatprep.subr.mxu0 0.0
        %1036 = vmatpush1.xpose.msra.mxu0 0.0
        %1037 = vmatprep.subr.mxu0 0.0
        %1038 = vmatpush1.xpose.msra.mxu0 0.0
        %1039 = vmatprep.subr.mxu0 0.0
        %1040 = vmatpush1.xpose.msra.mxu0 0.0
        %1041 = vmatprep.subr.mxu0 0.0
        %1042 = vmatpush1.xpose.msra.mxu0 0.0
        %1043 = vmatprep.subr.mxu0 0.0
        %1044 = vmatpush1.xpose.msra.mxu0 0.0
        %1045 = vmatprep.subr.mxu0 0.0
        %1046 = vmatpush1.xpose.msra.mxu0 0.0
        %1047 = vmatprep.mubr.f32.mxu0 0.0
        %1048 = vmatmul.mubr.f32.gmra.mrb[0].mxu0 %v966
        %v1049 = vpop.f32.mrb[0].mxu0
        %v1050 = vadd.f32 %v963, %v1049
        %v1051 = vpop.f32.mrb[0].mxu0
        %1052 = vmatprep.mubr.f32.mxu0 0.0
        %1053 = vmatmul.mubr.f32.gmra.mrb[0].mxu0 %v969
        %v1054 = vpop.f32.mrb[0].mxu0
        %v1055 = vadd.f32 %v963, %v1054
        %v1056 = vpop.f32.mrb[0].mxu0
        %1057 = vdwg.mxu0
        %v1058 = vld [vmem:[#allocation19] sm:$0xff]
        %v1059 = vld [vmem:[#allocation19 + $0x8] sm:$0xff]
        %v1060 = vld [vmem:[#allocation19 + $0x10] sm:$0xff]
        %v1061 = vld [vmem:[#allocation19 + $0x18] sm:$0xff]
        %vm1062 = vcmask 64512
        %v1064 = vsel %vm1062, %v847, 0
        %v1067 = vsel %vm1062, %v946, 0
        %v1070 = vsel %vm1062, %v951, 0
        %1072 = vmatprep.subr.mxu0 0.0
        %1073 = vmatpush1.xpose.msra.mxu0 %v1067
        %1074 = vmatprep.subr.mxu0 0.0
        %1075 = vmatpush1.xpose.msra.mxu0 %v1070
        %1076 = vmatprep.subr.mxu0 0.0
        %1077 = vmatpush1.xpose.msra.mxu0 0.0
        %1078 = vmatprep.subr.mxu0 0.0
        %1079 = vmatpush1.xpose.msra.mxu0 0.0
        %1080 = vmatprep.subr.mxu0 0.0
        %1081 = vmatpush1.xpose.msra.mxu0 0.0
        %1082 = vmatprep.subr.mxu0 0.0
        %1083 = vmatpush1.xpose.msra.mxu0 0.0
        %1084 = vmatprep.subr.mxu0 0.0
        %1085 = vmatpush1.xpose.msra.mxu0 0.0
        %1086 = vmatprep.subr.mxu0 0.0
        %1087 = vmatpush1.xpose.msra.mxu0 0.0
        %1088 = vmatprep.subr.mxu0 0.0
        %1089 = vmatpush1.xpose.msra.mxu0 0.0
        %1090 = vmatprep.subr.mxu0 0.0
        %1091 = vmatpush1.xpose.msra.mxu0 0.0
        %1092 = vmatprep.subr.mxu0 0.0
        %1093 = vmatpush1.xpose.msra.mxu0 0.0
        %1094 = vmatprep.subr.mxu0 0.0
        %1095 = vmatpush1.xpose.msra.mxu0 0.0
        %1096 = vmatprep.subr.mxu0 0.0
        %1097 = vmatpush1.xpose.msra.mxu0 0.0
        %1098 = vmatprep.subr.mxu0 0.0
        %1099 = vmatpush1.xpose.msra.mxu0 0.0
        %1100 = vmatprep.subr.mxu0 0.0
        %1101 = vmatpush1.xpose.msra.mxu0 0.0
        %1102 = vmatprep.subr.mxu0 0.0
        %1103 = vmatpush1.xpose.msra.mxu0 0.0
        %1104 = vmatprep.subr.mxu0 0.0
        %1105 = vmatpush1.xpose.msra.mxu0 0.0
        %1106 = vmatprep.subr.mxu0 0.0
        %1107 = vmatpush1.xpose.msra.mxu0 0.0
        %1108 = vmatprep.subr.mxu0 0.0
        %1109 = vmatpush1.xpose.msra.mxu0 0.0
        %1110 = vmatprep.subr.mxu0 0.0
        %1111 = vmatpush1.xpose.msra.mxu0 0.0
        %1112 = vmatprep.subr.mxu0 0.0
        %1113 = vmatpush1.xpose.msra.mxu0 0.0
        %1114 = vmatprep.subr.mxu0 0.0
        %1115 = vmatpush1.xpose.msra.mxu0 0.0
        %1116 = vmatprep.subr.mxu0 0.0
        %1117 = vmatpush1.xpose.msra.mxu0 0.0
        %1118 = vmatprep.subr.mxu0 0.0
        %1119 = vmatpush1.xpose.msra.mxu0 0.0
        %1120 = vmatprep.subr.mxu0 0.0
        %1121 = vmatpush1.xpose.msra.mxu0 0.0
        %1122 = vmatprep.subr.mxu0 0.0
        %1123 = vmatpush1.xpose.msra.mxu0 0.0
        %1124 = vmatprep.subr.mxu0 0.0
        %1125 = vmatpush1.xpose.msra.mxu0 0.0
        %1126 = vmatprep.subr.mxu0 0.0
        %1127 = vmatpush1.xpose.msra.mxu0 0.0
        %1128 = vmatprep.subr.mxu0 0.0
        %1129 = vmatpush1.xpose.msra.mxu0 0.0
        %1130 = vmatprep.subr.mxu0 0.0
        %1131 = vmatpush1.xpose.msra.mxu0 0.0
        %1132 = vmatprep.subr.mxu0 0.0
        %1133 = vmatpush1.xpose.msra.mxu0 0.0
        %1134 = vmatprep.subr.mxu0 0.0
        %1135 = vmatpush1.xpose.msra.mxu0 0.0
        %1136 = vmatprep.mubr.f32.mxu0 0.0
        %1137 = vmatmul.mubr.f32.gmra.mrb[0].mxu0 %v1064
        %v1138 = vpop.f32.mrb[0].mxu0
        %v1139 = vadd.f32 0.0, %v1138
        %v1140 = vpop.f32.mrb[0].mxu0
        %1141 = vdwg.mxu0
        %vm1142 = vcmask 130048
        %v1143 = vsel %vm1142, %v1139, -inf
        %1144 = vmax.xlane.f32.xlu0 %v1143
        %v1145 = vpop.xlane.xlu0 %1144
        %v1146 = vsub.f32 %v1139, %v1145
        %v1147 = vmul.f32 %v1146, 1.442695
        %v1148 = vpow.pop %v1147
        %v1149 = vsel %vm1142, %v1148, 0.0
        %1150 = vadd.xlane.f32.xlu0 %v1149
        %v1151 = vpop.xlane.xlu0 %1150
        %v1152 = vrcp.pop %v1151
        %v1153 = vmul.f32 %v752, %v1152
        %v1154 = vmul.f32 %v1148, %v1153
        %1155 = vst.msk [vmem:[%s739] sm:$0xff] %vm1142, %v1154
        %v1157 = vsel %vm1142, %v1154, 0
        %1159 = vmatprep.subr.mxu0 0.0
        %1160 = vmatpush1.msra.mxu0 %v1050
        %1161 = vmatprep.subr.mxu0 0.0
        %1162 = vmatpush1.msra.mxu0 %v1055
        %1163 = vmatprep.subr.mxu0 0.0
        %1164 = vmatpush1.msra.mxu0 0.0
        %1165 = vmatprep.subr.mxu0 0.0
        %1166 = vmatpush1.msra.mxu0 0.0
        %1167 = vmatprep.subr.mxu0 0.0
        %1168 = vmatpush1.msra.mxu0 0.0
        %1169 = vmatprep.subr.mxu0 0.0
        %1170 = vmatpush1.msra.mxu0 0.0
        %1171 = vmatprep.subr.mxu0 0.0
        %1172 = vmatpush1.msra.mxu0 0.0
        %1173 = vmatprep.subr.mxu0 0.0
        %1174 = vmatpush1.msra.mxu0 0.0
        %1175 = vmatprep.subr.mxu0 0.0
        %1176 = vmatpush1.msra.mxu0 0.0
        %1177 = vmatprep.subr.mxu0 0.0
        %1178 = vmatpush1.msra.mxu0 0.0
        %1179 = vmatprep.subr.mxu0 0.0
        %1180 = vmatpush1.msra.mxu0 0.0
        %1181 = vmatprep.subr.mxu0 0.0
        %1182 = vmatpush1.msra.mxu0 0.0
        %1183 = vmatprep.subr.mxu0 0.0
        %1184 = vmatpush1.msra.mxu0 0.0
        %1185 = vmatprep.subr.mxu0 0.0
        %1186 = vmatpush1.msra.mxu0 0.0
        %1187 = vmatprep.subr.mxu0 0.0
        %1188 = vmatpush1.msra.mxu0 0.0
        %1189 = vmatprep.subr.mxu0 0.0
        %1190 = vmatpush1.msra.mxu0 0.0
        %1191 = vmatprep.subr.mxu0 0.0
        %1192 = vmatpush1.msra.mxu0 0.0
        %1193 = vmatprep.subr.mxu0 0.0
        %1194 = vmatpush1.msra.mxu0 0.0
        %1195 = vmatprep.subr.mxu0 0.0
        %1196 = vmatpush1.msra.mxu0 0.0
        %1197 = vmatprep.subr.mxu0 0.0
        %1198 = vmatpush1.msra.mxu0 0.0
        %1199 = vmatprep.subr.mxu0 0.0
        %1200 = vmatpush1.msra.mxu0 0.0
        %1201 = vmatprep.subr.mxu0 0.0
        %1202 = vmatpush1.msra.mxu0 0.0
        %1203 = vmatprep.subr.mxu0 0.0
        %1204 = vmatpush1.msra.mxu0 0.0
        %1205 = vmatprep.subr.mxu0 0.0
        %1206 = vmatpush1.msra.mxu0 0.0
        %1207 = vmatprep.subr.mxu0 0.0
        %1208 = vmatpush1.msra.mxu0 0.0
        %1209 = vmatprep.subr.mxu0 0.0
        %1210 = vmatpush1.msra.mxu0 0.0
        %1211 = vmatprep.subr.mxu0 0.0
        %1212 = vmatpush1.msra.mxu0 0.0
        %1213 = vmatprep.subr.mxu0 0.0
        %1214 = vmatpush1.msra.mxu0 0.0
        %1215 = vmatprep.subr.mxu0 0.0
        %1216 = vmatpush1.msra.mxu0 0.0
        %1217 = vmatprep.subr.mxu0 0.0
        %1218 = vmatpush1.msra.mxu0 0.0
        %1219 = vmatprep.subr.mxu0 0.0
        %1220 = vmatpush1.msra.mxu0 0.0
        %1221 = vmatprep.subr.mxu0 0.0
        %1222 = vmatpush1.msra.mxu0 0.0
        %1223 = vmatprep.mubr.f32.mxu0 0.0
        %1224 = vmatmul.mubr.f32.gmra.mrb[0].mxu0 %v1157
        %v1225 = vpop.f32.mrb[0].mxu0
        %v1226 = vadd.f32 0.0, %v1225
        %v1227 = vpop.f32.mrb[0].mxu0
        %1228 = vdwg.mxu0
        %1229 = vrot.lane.b32.xlu0 %v847, 120
        %v1230 = vpop.permute.xlu0 %1229
        %1231 = vrot.lane.b32.xlu0 %v946, 120
        %v1232 = vpop.permute.xlu0 %1231
        %1233 = vrot.lane.b32.xlu0 %v951, 120
        %v1234 = vpop.permute.xlu0 %1233
        %v1235 = vsel %vm1062, %v1230, 0
        %v1237 = vsel %vm1062, %v1232, 0
        %v1239 = vsel %vm1062, %v1234, 0
        %1241 = vmatprep.subr.mxu0 0.0
        %1242 = vmatpush1.xpose.msra.mxu0 %v1237
        %1243 = vmatprep.subr.mxu0 0.0
        %1244 = vmatpush1.xpose.msra.mxu0 %v1239
        %1245 = vmatprep.subr.mxu0 0.0
        %1246 = vmatpush1.xpose.msra.mxu0 0.0
        %1247 = vmatprep.subr.mxu0 0.0
        %1248 = vmatpush1.xpose.msra.mxu0 0.0
        %1249 = vmatprep.subr.mxu0 0.0
        %1250 = vmatpush1.xpose.msra.mxu0 0.0
        %1251 = vmatprep.subr.mxu0 0.0
        %1252 = vmatpush1.xpose.msra.mxu0 0.0
        %1253 = vmatprep.subr.mxu0 0.0
        %1254 = vmatpush1.xpose.msra.mxu0 0.0
        %1255 = vmatprep.subr.mxu0 0.0
        %1256 = vmatpush1.xpose.msra.mxu0 0.0
        %1257 = vmatprep.subr.mxu0 0.0
        %1258 = vmatpush1.xpose.msra.mxu0 0.0
        %1259 = vmatprep.subr.mxu0 0.0
        %1260 = vmatpush1.xpose.msra.mxu0 0.0
        %1261 = vmatprep.subr.mxu0 0.0
        %1262 = vmatpush1.xpose.msra.mxu0 0.0
        %1263 = vmatprep.subr.mxu0 0.0
        %1264 = vmatpush1.xpose.msra.mxu0 0.0
        %1265 = vmatprep.subr.mxu0 0.0
        %1266 = vmatpush1.xpose.msra.mxu0 0.0
        %1267 = vmatprep.subr.mxu0 0.0
        %1268 = vmatpush1.xpose.msra.mxu0 0.0
        %1269 = vmatprep.subr.mxu0 0.0
        %1270 = vmatpush1.xpose.msra.mxu0 0.0
        %1271 = vmatprep.subr.mxu0 0.0
        %1272 = vmatpush1.xpose.msra.mxu0 0.0
        %1273 = vmatprep.subr.mxu0 0.0
        %1274 = vmatpush1.xpose.msra.mxu0 0.0
        %1275 = vmatprep.subr.mxu0 0.0
        %1276 = vmatpush1.xpose.msra.mxu0 0.0
        %1277 = vmatprep.subr.mxu0 0.0
        %1278 = vmatpush1.xpose.msra.mxu0 0.0
        %1279 = vmatprep.subr.mxu0 0.0
        %1280 = vmatpush1.xpose.msra.mxu0 0.0
        %1281 = vmatprep.subr.mxu0 0.0
        %1282 = vmatpush1.xpose.msra.mxu0 0.0
        %1283 = vmatprep.subr.mxu0 0.0
        %1284 = vmatpush1.xpose.msra.mxu0 0.0
        %1285 = vmatprep.subr.mxu0 0.0
        %1286 = vmatpush1.xpose.msra.mxu0 0.0
        %1287 = vmatprep.subr.mxu0 0.0
        %1288 = vmatpush1.xpose.msra.mxu0 0.0
        %1289 = vmatprep.subr.mxu0 0.0
        %1290 = vmatpush1.xpose.msra.mxu0 0.0
        %1291 = vmatprep.subr.mxu0 0.0
        %1292 = vmatpush1.xpose.msra.mxu0 0.0
        %1293 = vmatprep.subr.mxu0 0.0
        %1294 = vmatpush1.xpose.msra.mxu0 0.0
        %1295 = vmatprep.subr.mxu0 0.0
        %1296 = vmatpush1.xpose.msra.mxu0 0.0
        %1297 = vmatprep.subr.mxu0 0.0
        %1298 = vmatpush1.xpose.msra.mxu0 0.0
        %1299 = vmatprep.subr.mxu0 0.0
        %1300 = vmatpush1.xpose.msra.mxu0 0.0
        %1301 = vmatprep.subr.mxu0 0.0
        %1302 = vmatpush1.xpose.msra.mxu0 0.0
        %1303 = vmatprep.subr.mxu0 0.0
        %1304 = vmatpush1.xpose.msra.mxu0 0.0
        %1305 = vmatprep.mubr.f32.mxu0 0.0
        %1306 = vmatmul.mubr.f32.gmra.mrb[0].mxu0 %v1235
        %v1307 = vpop.f32.mrb[0].mxu0
        %v1308 = vadd.f32 0.0, %v1307
        %v1309 = vpop.f32.mrb[0].mxu0
        %1310 = vdwg.mxu0
        %v1311 = vsel %vm1142, %v1308, -inf
        %1312 = vmax.xlane.f32.xlu0 %v1311
        %v1313 = vpop.xlane.xlu0 %1312
        %v1314 = vsub.f32 %v1308, %v1313
        %v1315 = vmul.f32 %v1314, 1.442695
        %v1316 = vpow.pop %v1315
        %v1317 = vsel %vm1142, %v1316, 0.0
        %1318 = vadd.xlane.f32.xlu0 %v1317
        %v1319 = vpop.xlane.xlu0 %1318
        %v1320 = vrcp.pop %v1319
        %v1321 = vmul.f32 %v752, %v1320
        %v1322 = vmul.f32 %v1316, %v1321
        %s1323 = scalar_lea.vmem %s739, 8 [#allocation23]
        %1324 = vst.msk [vmem:[%s1323] sm:$0xff] %vm1142, %v1322
        %v1325 = vadd.f32 %v1154, %v1322
        %1328 = vrot.lane.b32.xlu0 %v1050, 120
        %v1329 = vpop.permute.xlu0 %1328
        %1330 = vrot.lane.b32.xlu0 %v1055, 120
        %v1331 = vpop.permute.xlu0 %1330
        %v1335 = vsel %vm1142, %v1322, 0
        %1337 = vmatprep.subr.mxu0 0.0
        %1338 = vmatpush1.msra.mxu0 %v1329
        %1339 = vmatprep.subr.mxu0 0.0
        %1340 = vmatpush1.msra.mxu0 %v1331
        %1341 = vmatprep.subr.mxu0 0.0
        %1342 = vmatpush1.msra.mxu0 0.0
        %1343 = vmatprep.subr.mxu0 0.0
        %1344 = vmatpush1.msra.mxu0 0.0
        %1345 = vmatprep.subr.mxu0 0.0
        %1346 = vmatpush1.msra.mxu0 0.0
        %1347 = vmatprep.subr.mxu0 0.0
        %1348 = vmatpush1.msra.mxu0 0.0
        %1349 = vmatprep.subr.mxu0 0.0
        %1350 = vmatpush1.msra.mxu0 0.0
        %1351 = vmatprep.subr.mxu0 0.0
        %1352 = vmatpush1.msra.mxu0 0.0
        %1353 = vmatprep.subr.mxu0 0.0
        %1354 = vmatpush1.msra.mxu0 0.0
        %1355 = vmatprep.subr.mxu0 0.0
        %1356 = vmatpush1.msra.mxu0 0.0
        %1357 = vmatprep.subr.mxu0 0.0
        %1358 = vmatpush1.msra.mxu0 0.0
        %1359 = vmatprep.subr.mxu0 0.0
        %1360 = vmatpush1.msra.mxu0 0.0
        %1361 = vmatprep.subr.mxu0 0.0
        %1362 = vmatpush1.msra.mxu0 0.0
        %1363 = vmatprep.subr.mxu0 0.0
        %1364 = vmatpush1.msra.mxu0 0.0
        %1365 = vmatprep.subr.mxu0 0.0
        %1366 = vmatpush1.msra.mxu0 0.0
        %1367 = vmatprep.subr.mxu0 0.0
        %1368 = vmatpush1.msra.mxu0 0.0
        %1369 = vmatprep.subr.mxu0 0.0
        %1370 = vmatpush1.msra.mxu0 0.0
        %1371 = vmatprep.subr.mxu0 0.0
        %1372 = vmatpush1.msra.mxu0 0.0
        %1373 = vmatprep.subr.mxu0 0.0
        %1374 = vmatpush1.msra.mxu0 0.0
        %1375 = vmatprep.subr.mxu0 0.0
        %1376 = vmatpush1.msra.mxu0 0.0
        %1377 = vmatprep.subr.mxu0 0.0
        %1378 = vmatpush1.msra.mxu0 0.0
        %1379 = vmatprep.subr.mxu0 0.0
        %1380 = vmatpush1.msra.mxu0 0.0
        %1381 = vmatprep.subr.mxu0 0.0
        %1382 = vmatpush1.msra.mxu0 0.0
        %1383 = vmatprep.subr.mxu0 0.0
        %1384 = vmatpush1.msra.mxu0 0.0
        %1385 = vmatprep.subr.mxu0 0.0
        %1386 = vmatpush1.msra.mxu0 0.0
        %1387 = vmatprep.subr.mxu0 0.0
        %1388 = vmatpush1.msra.mxu0 0.0
        %1389 = vmatprep.subr.mxu0 0.0
        %1390 = vmatpush1.msra.mxu0 0.0
        %1391 = vmatprep.subr.mxu0 0.0
        %1392 = vmatpush1.msra.mxu0 0.0
        %1393 = vmatprep.subr.mxu0 0.0
        %1394 = vmatpush1.msra.mxu0 0.0
        %1395 = vmatprep.subr.mxu0 0.0
        %1396 = vmatpush1.msra.mxu0 0.0
        %1397 = vmatprep.subr.mxu0 0.0
        %1398 = vmatpush1.msra.mxu0 0.0
        %1399 = vmatprep.subr.mxu0 0.0
        %1400 = vmatpush1.msra.mxu0 0.0
        %1401 = vmatprep.mubr.f32.mxu0 0.0
        %1402 = vmatmul.mubr.f32.gmra.mrb[0].mxu0 %v1335
        %v1403 = vpop.f32.mrb[0].mxu0
        %v1404 = vadd.f32 0.0, %v1403
        %v1405 = vpop.f32.mrb[0].mxu0
        %1406 = vdwg.mxu0
        %1411 = vrot.lane.b32.xlu0 %v1058, 120
        %v1412 = vpop.permute.xlu0 %1411
        %1413 = vrot.lane.b32.xlu0 %v1059, 120
        %v1414 = vpop.permute.xlu0 %1413
        %1415 = vrot.lane.b32.xlu0 %v1060, 120
        %v1416 = vpop.permute.xlu0 %1415
        %1417 = vrot.lane.b32.xlu0 %v1061, 120
        %v1418 = vpop.permute.xlu0 %1417
        %v1420 = vsel %vm1062, %v1404, 0
        %v1422 = vsel %vm1062, %v1412, 0
        %v1424 = vsel %vm1062, %v1414, 0
        %v1426 = vsel %vm1062, %v1416, 0
        %v1428 = vsel %vm1062, %v1418, 0
        %1430 = vmatprep.subr.mxu0 0.0
        %1431 = vmatpush1.xpose.msra.mxu0 %v1422
        %1432 = vmatprep.subr.mxu0 0.0
        %1433 = vmatpush1.xpose.msra.mxu0 %v1424
        %1434 = vmatprep.subr.mxu0 0.0
        %1435 = vmatpush1.xpose.msra.mxu0 %v1426
        %1436 = vmatprep.subr.mxu0 0.0
        %1437 = vmatpush1.xpose.msra.mxu0 %v1428
        %1438 = vmatprep.subr.mxu0 0.0
        %1439 = vmatpush1.xpose.msra.mxu0 0.0
        %1440 = vmatprep.subr.mxu0 0.0
        %1441 = vmatpush1.xpose.msra.mxu0 0.0
        %1442 = vmatprep.subr.mxu0 0.0
        %1443 = vmatpush1.xpose.msra.mxu0 0.0
        %1444 = vmatprep.subr.mxu0 0.0
        %1445 = vmatpush1.xpose.msra.mxu0 0.0
        %1446 = vmatprep.subr.mxu0 0.0
        %1447 = vmatpush1.xpose.msra.mxu0 0.0
        %1448 = vmatprep.subr.mxu0 0.0
        %1449 = vmatpush1.xpose.msra.mxu0 0.0
        %1450 = vmatprep.subr.mxu0 0.0
        %1451 = vmatpush1.xpose.msra.mxu0 0.0
        %1452 = vmatprep.subr.mxu0 0.0
        %1453 = vmatpush1.xpose.msra.mxu0 0.0
        %1454 = vmatprep.subr.mxu0 0.0
        %1455 = vmatpush1.xpose.msra.mxu0 0.0
        %1456 = vmatprep.subr.mxu0 0.0
        %1457 = vmatpush1.xpose.msra.mxu0 0.0
        %1458 = vmatprep.subr.mxu0 0.0
        %1459 = vmatpush1.xpose.msra.mxu0 0.0
        %1460 = vmatprep.subr.mxu0 0.0
        %1461 = vmatpush1.xpose.msra.mxu0 0.0
        %1462 = vmatprep.subr.mxu0 0.0
        %1463 = vmatpush1.xpose.msra.mxu0 0.0
        %1464 = vmatprep.subr.mxu0 0.0
        %1465 = vmatpush1.xpose.msra.mxu0 0.0
        %1466 = vmatprep.subr.mxu0 0.0
        %1467 = vmatpush1.xpose.msra.mxu0 0.0
        %1468 = vmatprep.subr.mxu0 0.0
        %1469 = vmatpush1.xpose.msra.mxu0 0.0
        %1470 = vmatprep.subr.mxu0 0.0
        %1471 = vmatpush1.xpose.msra.mxu0 0.0
        %1472 = vmatprep.subr.mxu0 0.0
        %1473 = vmatpush1.xpose.msra.mxu0 0.0
        %1474 = vmatprep.subr.mxu0 0.0
        %1475 = vmatpush1.xpose.msra.mxu0 0.0
        %1476 = vmatprep.subr.mxu0 0.0
        %1477 = vmatpush1.xpose.msra.mxu0 0.0
        %1478 = vmatprep.subr.mxu0 0.0
        %1479 = vmatpush1.xpose.msra.mxu0 0.0
        %1480 = vmatprep.subr.mxu0 0.0
        %1481 = vmatpush1.xpose.msra.mxu0 0.0
        %1482 = vmatprep.subr.mxu0 0.0
        %1483 = vmatpush1.xpose.msra.mxu0 0.0
        %1484 = vmatprep.subr.mxu0 0.0
        %1485 = vmatpush1.xpose.msra.mxu0 0.0
        %1486 = vmatprep.subr.mxu0 0.0
        %1487 = vmatpush1.xpose.msra.mxu0 0.0
        %1488 = vmatprep.subr.mxu0 0.0
        %1489 = vmatpush1.xpose.msra.mxu0 0.0
        %1490 = vmatprep.subr.mxu0 0.0
        %1491 = vmatpush1.xpose.msra.mxu0 0.0
        %1492 = vmatprep.subr.mxu0 0.0
        %1493 = vmatpush1.xpose.msra.mxu0 0.0
        %1494 = vmatprep.mubr.f32.mxu0 0.0
        %1495 = vmatmul.mubr.f32.gmra.mrb[0].mxu0 %v1420
        %v1496 = vpop.f32.mrb[0].mxu0
        %v1497 = vadd.f32 0.0, %v1496
        %v1498 = vpop.f32.mrb[0].mxu0
        %1499 = vdwg.mxu0
        %v1501 = vsel %vm1062, %v1226, 0
        %v1503 = vsel %vm1062, %v1058, 0
        %v1505 = vsel %vm1062, %v1059, 0
        %v1507 = vsel %vm1062, %v1060, 0
        %v1509 = vsel %vm1062, %v1061, 0
        %1511 = vmatprep.subr.mxu0 0.0
        %1512 = vmatpush1.xpose.msra.mxu0 %v1503
        %1513 = vmatprep.subr.mxu0 0.0
        %1514 = vmatpush1.xpose.msra.mxu0 %v1505
        %1515 = vmatprep.subr.mxu0 0.0
        %1516 = vmatpush1.xpose.msra.mxu0 %v1507
        %1517 = vmatprep.subr.mxu0 0.0
        %1518 = vmatpush1.xpose.msra.mxu0 %v1509
        %1519 = vmatprep.subr.mxu0 0.0
        %1520 = vmatpush1.xpose.msra.mxu0 0.0
        %1521 = vmatprep.subr.mxu0 0.0
        %1522 = vmatpush1.xpose.msra.mxu0 0.0
        %1523 = vmatprep.subr.mxu0 0.0
        %1524 = vmatpush1.xpose.msra.mxu0 0.0
        %1525 = vmatprep.subr.mxu0 0.0
        %1526 = vmatpush1.xpose.msra.mxu0 0.0
        %1527 = vmatprep.subr.mxu0 0.0
        %1528 = vmatpush1.xpose.msra.mxu0 0.0
        %1529 = vmatprep.subr.mxu0 0.0
        %1530 = vmatpush1.xpose.msra.mxu0 0.0
        %1531 = vmatprep.subr.mxu0 0.0
        %1532 = vmatpush1.xpose.msra.mxu0 0.0
        %1533 = vmatprep.subr.mxu0 0.0
        %1534 = vmatpush1.xpose.msra.mxu0 0.0
        %1535 = vmatprep.subr.mxu0 0.0
        %1536 = vmatpush1.xpose.msra.mxu0 0.0
        %1537 = vmatprep.subr.mxu0 0.0
        %1538 = vmatpush1.xpose.msra.mxu0 0.0
        %1539 = vmatprep.subr.mxu0 0.0
        %1540 = vmatpush1.xpose.msra.mxu0 0.0
        %1541 = vmatprep.subr.mxu0 0.0
        %1542 = vmatpush1.xpose.msra.mxu0 0.0
        %1543 = vmatprep.subr.mxu0 0.0
        %1544 = vmatpush1.xpose.msra.mxu0 0.0
        %1545 = vmatprep.subr.mxu0 0.0
        %1546 = vmatpush1.xpose.msra.mxu0 0.0
        %1547 = vmatprep.subr.mxu0 0.0
        %1548 = vmatpush1.xpose.msra.mxu0 0.0
        %1549 = vmatprep.subr.mxu0 0.0
        %1550 = vmatpush1.xpose.msra.mxu0 0.0
        %1551 = vmatprep.subr.mxu0 0.0
        %1552 = vmatpush1.xpose.msra.mxu0 0.0
        %1553 = vmatprep.subr.mxu0 0.0
        %1554 = vmatpush1.xpose.msra.mxu0 0.0
        %1555 = vmatprep.subr.mxu0 0.0
        %1556 = vmatpush1.xpose.msra.mxu0 0.0
        %1557 = vmatprep.subr.mxu0 0.0
        %1558 = vmatpush1.xpose.msra.mxu0 0.0
        %1559 = vmatprep.subr.mxu0 0.0
        %1560 = vmatpush1.xpose.msra.mxu0 0.0
        %1561 = vmatprep.subr.mxu0 0.0
        %1562 = vmatpush1.xpose.msra.mxu0 0.0
        %1563 = vmatprep.subr.mxu0 0.0
        %1564 = vmatpush1.xpose.msra.mxu0 0.0
        %1565 = vmatprep.subr.mxu0 0.0
        %1566 = vmatpush1.xpose.msra.mxu0 0.0
        %1567 = vmatprep.subr.mxu0 0.0
        %1568 = vmatpush1.xpose.msra.mxu0 0.0
        %1569 = vmatprep.subr.mxu0 0.0
        %1570 = vmatpush1.xpose.msra.mxu0 0.0
        %1571 = vmatprep.subr.mxu0 0.0
        %1572 = vmatpush1.xpose.msra.mxu0 0.0
        %1573 = vmatprep.subr.mxu0 0.0
        %1574 = vmatpush1.xpose.msra.mxu0 0.0
        %1575 = vmatprep.mubr.f32.mxu0 0.0
        %1576 = vmatmul.mubr.f32.gmra.mrb[0].mxu0 %v1501
        %v1577 = vpop.f32.mrb[0].mxu0
        %v1578 = vadd.f32 %v1497, %v1577
        %v1579 = vpop.f32.mrb[0].mxu0
        %1580 = vdwg.mxu0
        %1581 = vrot.lane.b32.xlu0 %v847, 112
        %v1582 = vpop.permute.xlu0 %1581
        %1583 = vrot.lane.b32.xlu0 %v946, 112
        %v1584 = vpop.permute.xlu0 %1583
        %1585 = vrot.lane.b32.xlu0 %v951, 112
        %v1586 = vpop.permute.xlu0 %1585
        %v1587 = vsel %vm1062, %v1582, 0
        %v1589 = vsel %vm1062, %v1584, 0
        %v1591 = vsel %vm1062, %v1586, 0
        %1593 = vmatprep.subr.mxu0 0.0
        %1594 = vmatpush1.xpose.msra.mxu0 %v1589
        %1595 = vmatprep.subr.mxu0 0.0
        %1596 = vmatpush1.xpose.msra.mxu0 %v1591
        %1597 = vmatprep.subr.mxu0 0.0
        %1598 = vmatpush1.xpose.msra.mxu0 0.0
        %1599 = vmatprep.subr.mxu0 0.0
        %1600 = vmatpush1.xpose.msra.mxu0 0.0
        %1601 = vmatprep.subr.mxu0 0.0
        %1602 = vmatpush1.xpose.msra.mxu0 0.0
        %1603 = vmatprep.subr.mxu0 0.0
        %1604 = vmatpush1.xpose.msra.mxu0 0.0
        %1605 = vmatprep.subr.mxu0 0.0
        %1606 = vmatpush1.xpose.msra.mxu0 0.0
        %1607 = vmatprep.subr.mxu0 0.0
        %1608 = vmatpush1.xpose.msra.mxu0 0.0
        %1609 = vmatprep.subr.mxu0 0.0
        %1610 = vmatpush1.xpose.msra.mxu0 0.0
        %1611 = vmatprep.subr.mxu0 0.0
        %1612 = vmatpush1.xpose.msra.mxu0 0.0
        %1613 = vmatprep.subr.mxu0 0.0
        %1614 = vmatpush1.xpose.msra.mxu0 0.0
        %1615 = vmatprep.subr.mxu0 0.0
        %1616 = vmatpush1.xpose.msra.mxu0 0.0
        %1617 = vmatprep.subr.mxu0 0.0
        %1618 = vmatpush1.xpose.msra.mxu0 0.0
        %1619 = vmatprep.subr.mxu0 0.0
        %1620 = vmatpush1.xpose.msra.mxu0 0.0
        %1621 = vmatprep.subr.mxu0 0.0
        %1622 = vmatpush1.xpose.msra.mxu0 0.0
        %1623 = vmatprep.subr.mxu0 0.0
        %1624 = vmatpush1.xpose.msra.mxu0 0.0
        %1625 = vmatprep.subr.mxu0 0.0
        %1626 = vmatpush1.xpose.msra.mxu0 0.0
        %1627 = vmatprep.subr.mxu0 0.0
        %1628 = vmatpush1.xpose.msra.mxu0 0.0
        %1629 = vmatprep.subr.mxu0 0.0
        %1630 = vmatpush1.xpose.msra.mxu0 0.0
        %1631 = vmatprep.subr.mxu0 0.0
        %1632 = vmatpush1.xpose.msra.mxu0 0.0
        %1633 = vmatprep.subr.mxu0 0.0
        %1634 = vmatpush1.xpose.msra.mxu0 0.0
        %1635 = vmatprep.subr.mxu0 0.0
        %1636 = vmatpush1.xpose.msra.mxu0 0.0
        %1637 = vmatprep.subr.mxu0 0.0
        %1638 = vmatpush1.xpose.msra.mxu0 0.0
        %1639 = vmatprep.subr.mxu0 0.0
        %1640 = vmatpush1.xpose.msra.mxu0 0.0
        %1641 = vmatprep.subr.mxu0 0.0
        %1642 = vmatpush1.xpose.msra.mxu0 0.0
        %1643 = vmatprep.subr.mxu0 0.0
        %1644 = vmatpush1.xpose.msra.mxu0 0.0
        %1645 = vmatprep.subr.mxu0 0.0
        %1646 = vmatpush1.xpose.msra.mxu0 0.0
        %1647 = vmatprep.subr.mxu0 0.0
        %1648 = vmatpush1.xpose.msra.mxu0 0.0
        %1649 = vmatprep.subr.mxu0 0.0
        %1650 = vmatpush1.xpose.msra.mxu0 0.0
        %1651 = vmatprep.subr.mxu0 0.0
        %1652 = vmatpush1.xpose.msra.mxu0 0.0
        %1653 = vmatprep.subr.mxu0 0.0
        %1654 = vmatpush1.xpose.msra.mxu0 0.0
        %1655 = vmatprep.subr.mxu0 0.0
        %1656 = vmatpush1.xpose.msra.mxu0 0.0
        %1657 = vmatprep.mubr.f32.mxu0 0.0
        %1658 = vmatmul.mubr.f32.gmra.mrb[0].mxu0 %v1587
        %v1659 = vpop.f32.mrb[0].mxu0
        %v1660 = vadd.f32 0.0, %v1659
        %v1661 = vpop.f32.mrb[0].mxu0
        %1662 = vdwg.mxu0
        %v1663 = vsel %vm1142, %v1660, -inf
        %1664 = vmax.xlane.f32.xlu0 %v1663
        %v1665 = vpop.xlane.xlu0 %1664
        %v1666 = vsub.f32 %v1660, %v1665
        %v1667 = vmul.f32 %v1666, 1.442695
        %v1668 = vpow.pop %v1667
        %v1669 = vsel %vm1142, %v1668, 0.0
        %1670 = vadd.xlane.f32.xlu0 %v1669
        %v1671 = vpop.xlane.xlu0 %1670
        %v1672 = vrcp.pop %v1671
        %v1673 = vmul.f32 %v752, %v1672
        %v1674 = vmul.f32 %v1668, %v1673
        %s1675 = scalar_lea.vmem %s739, 16 [#allocation23]
        %1676 = vst.msk [vmem:[%s1675] sm:$0xff] %vm1142, %v1674
        %v1677 = vadd.f32 %v1325, %v1674
        %1678 = vrot.lane.b32.xlu0 %v1050, 112
        %v1679 = vpop.permute.xlu0 %1678
        %1680 = vrot.lane.b32.xlu0 %v1055, 112
        %v1681 = vpop.permute.xlu0 %1680
        %v1685 = vsel %vm1142, %v1674, 0
        %1687 = vmatprep.subr.mxu0 0.0
        %1688 = vmatpush1.msra.mxu0 %v1679
        %1689 = vmatprep.subr.mxu0 0.0
        %1690 = vmatpush1.msra.mxu0 %v1681
        %1691 = vmatprep.subr.mxu0 0.0
        %1692 = vmatpush1.msra.mxu0 0.0
        %1693 = vmatprep.subr.mxu0 0.0
        %1694 = vmatpush1.msra.mxu0 0.0
        %1695 = vmatprep.subr.mxu0 0.0
        %1696 = vmatpush1.msra.mxu0 0.0
        %1697 = vmatprep.subr.mxu0 0.0
        %1698 = vmatpush1.msra.mxu0 0.0
        %1699 = vmatprep.subr.mxu0 0.0
        %1700 = vmatpush1.msra.mxu0 0.0
        %1701 = vmatprep.subr.mxu0 0.0
        %1702 = vmatpush1.msra.mxu0 0.0
        %1703 = vmatprep.subr.mxu0 0.0
        %1704 = vmatpush1.msra.mxu0 0.0
        %1705 = vmatprep.subr.mxu0 0.0
        %1706 = vmatpush1.msra.mxu0 0.0
        %1707 = vmatprep.subr.mxu0 0.0
        %1708 = vmatpush1.msra.mxu0 0.0
        %1709 = vmatprep.subr.mxu0 0.0
        %1710 = vmatpush1.msra.mxu0 0.0
        %1711 = vmatprep.subr.mxu0 0.0
        %1712 = vmatpush1.msra.mxu0 0.0
        %1713 = vmatprep.subr.mxu0 0.0
        %1714 = vmatpush1.msra.mxu0 0.0
        %1715 = vmatprep.subr.mxu0 0.0
        %1716 = vmatpush1.msra.mxu0 0.0
        %1717 = vmatprep.subr.mxu0 0.0
        %1718 = vmatpush1.msra.mxu0 0.0
        %1719 = vmatprep.subr.mxu0 0.0
        %1720 = vmatpush1.msra.mxu0 0.0
        %1721 = vmatprep.subr.mxu0 0.0
        %1722 = vmatpush1.msra.mxu0 0.0
        %1723 = vmatprep.subr.mxu0 0.0
        %1724 = vmatpush1.msra.mxu0 0.0
        %1725 = vmatprep.subr.mxu0 0.0
        %1726 = vmatpush1.msra.mxu0 0.0
        %1727 = vmatprep.subr.mxu0 0.0
        %1728 = vmatpush1.msra.mxu0 0.0
        %1729 = vmatprep.subr.mxu0 0.0
        %1730 = vmatpush1.msra.mxu0 0.0
        %1731 = vmatprep.subr.mxu0 0.0
        %1732 = vmatpush1.msra.mxu0 0.0
        %1733 = vmatprep.subr.mxu0 0.0
        %1734 = vmatpush1.msra.mxu0 0.0
        %1735 = vmatprep.subr.mxu0 0.0
        %1736 = vmatpush1.msra.mxu0 0.0
        %1737 = vmatprep.subr.mxu0 0.0
        %1738 = vmatpush1.msra.mxu0 0.0
        %1739 = vmatprep.subr.mxu0 0.0
        %1740 = vmatpush1.msra.mxu0 0.0
        %1741 = vmatprep.subr.mxu0 0.0
        %1742 = vmatpush1.msra.mxu0 0.0
        %1743 = vmatprep.subr.mxu0 0.0
        %1744 = vmatpush1.msra.mxu0 0.0
        %1745 = vmatprep.subr.mxu0 0.0
        %1746 = vmatpush1.msra.mxu0 0.0
        %1747 = vmatprep.subr.mxu0 0.0
        %1748 = vmatpush1.msra.mxu0 0.0
        %1749 = vmatprep.subr.mxu0 0.0
        %1750 = vmatpush1.msra.mxu0 0.0
        %1751 = vmatprep.mubr.f32.mxu0 0.0
        %1752 = vmatmul.mubr.f32.gmra.mrb[0].mxu0 %v1685
        %v1753 = vpop.f32.mrb[0].mxu0
        %v1754 = vadd.f32 0.0, %v1753
        %v1755 = vpop.f32.mrb[0].mxu0
        %1756 = vdwg.mxu0
        %1757 = vrot.lane.b32.xlu0 %v1058, 112
        %v1758 = vpop.permute.xlu0 %1757
        %1759 = vrot.lane.b32.xlu0 %v1059, 112
        %v1760 = vpop.permute.xlu0 %1759
        %1761 = vrot.lane.b32.xlu0 %v1060, 112
        %v1762 = vpop.permute.xlu0 %1761
        %1763 = vrot.lane.b32.xlu0 %v1061, 112
        %v1764 = vpop.permute.xlu0 %1763
        %v1766 = vsel %vm1062, %v1754, 0
        %v1768 = vsel %vm1062, %v1758, 0
        %v1770 = vsel %vm1062, %v1760, 0
        %v1772 = vsel %vm1062, %v1762, 0
        %v1774 = vsel %vm1062, %v1764, 0
        %1776 = vmatprep.subr.mxu0 0.0
        %1777 = vmatpush1.xpose.msra.mxu0 %v1768
        %1778 = vmatprep.subr.mxu0 0.0
        %1779 = vmatpush1.xpose.msra.mxu0 %v1770
        %1780 = vmatprep.subr.mxu0 0.0
        %1781 = vmatpush1.xpose.msra.mxu0 %v1772
        %1782 = vmatprep.subr.mxu0 0.0
        %1783 = vmatpush1.xpose.msra.mxu0 %v1774
        %1784 = vmatprep.subr.mxu0 0.0
        %1785 = vmatpush1.xpose.msra.mxu0 0.0
        %1786 = vmatprep.subr.mxu0 0.0
        %1787 = vmatpush1.xpose.msra.mxu0 0.0
        %1788 = vmatprep.subr.mxu0 0.0
        %1789 = vmatpush1.xpose.msra.mxu0 0.0
        %1790 = vmatprep.subr.mxu0 0.0
        %1791 = vmatpush1.xpose.msra.mxu0 0.0
        %1792 = vmatprep.subr.mxu0 0.0
        %1793 = vmatpush1.xpose.msra.mxu0 0.0
        %1794 = vmatprep.subr.mxu0 0.0
        %1795 = vmatpush1.xpose.msra.mxu0 0.0
        %1796 = vmatprep.subr.mxu0 0.0
        %1797 = vmatpush1.xpose.msra.mxu0 0.0
        %1798 = vmatprep.subr.mxu0 0.0
        %1799 = vmatpush1.xpose.msra.mxu0 0.0
        %1800 = vmatprep.subr.mxu0 0.0
        %1801 = vmatpush1.xpose.msra.mxu0 0.0
        %1802 = vmatprep.subr.mxu0 0.0
        %1803 = vmatpush1.xpose.msra.mxu0 0.0
        %1804 = vmatprep.subr.mxu0 0.0
        %1805 = vmatpush1.xpose.msra.mxu0 0.0
        %1806 = vmatprep.subr.mxu0 0.0
        %1807 = vmatpush1.xpose.msra.mxu0 0.0
        %1808 = vmatprep.subr.mxu0 0.0
        %1809 = vmatpush1.xpose.msra.mxu0 0.0
        %1810 = vmatprep.subr.mxu0 0.0
        %1811 = vmatpush1.xpose.msra.mxu0 0.0
        %1812 = vmatprep.subr.mxu0 0.0
        %1813 = vmatpush1.xpose.msra.mxu0 0.0
        %1814 = vmatprep.subr.mxu0 0.0
        %1815 = vmatpush1.xpose.msra.mxu0 0.0
        %1816 = vmatprep.subr.mxu0 0.0
        %1817 = vmatpush1.xpose.msra.mxu0 0.0
        %1818 = vmatprep.subr.mxu0 0.0
        %1819 = vmatpush1.xpose.msra.mxu0 0.0
        %1820 = vmatprep.subr.mxu0 0.0
        %1821 = vmatpush1.xpose.msra.mxu0 0.0
        %1822 = vmatprep.subr.mxu0 0.0
        %1823 = vmatpush1.xpose.msra.mxu0 0.0
        %1824 = vmatprep.subr.mxu0 0.0
        %1825 = vmatpush1.xpose.msra.mxu0 0.0
        %1826 = vmatprep.subr.mxu0 0.0
        %1827 = vmatpush1.xpose.msra.mxu0 0.0
        %1828 = vmatprep.subr.mxu0 0.0
        %1829 = vmatpush1.xpose.msra.mxu0 0.0
        %1830 = vmatprep.subr.mxu0 0.0
        %1831 = vmatpush1.xpose.msra.mxu0 0.0
        %1832 = vmatprep.subr.mxu0 0.0
        %1833 = vmatpush1.xpose.msra.mxu0 0.0
        %1834 = vmatprep.subr.mxu0 0.0
        %1835 = vmatpush1.xpose.msra.mxu0 0.0
        %1836 = vmatprep.subr.mxu0 0.0
        %1837 = vmatpush1.xpose.msra.mxu0 0.0
        %1838 = vmatprep.subr.mxu0 0.0
        %1839 = vmatpush1.xpose.msra.mxu0 0.0
        %1840 = vmatprep.mubr.f32.mxu0 0.0
        %1841 = vmatmul.mubr.f32.gmra.mrb[0].mxu0 %v1766
        %v1842 = vpop.f32.mrb[0].mxu0
        %v1843 = vadd.f32 0.0, %v1842
        %v1844 = vpop.f32.mrb[0].mxu0
        %1845 = vdwg.mxu0
        %v1846 = vadd.f32 %v1578, %v1843
        %1847 = vrot.lane.b32.xlu0 %v847, 104
        %v1848 = vpop.permute.xlu0 %1847
        %1849 = vrot.lane.b32.xlu0 %v946, 104
        %v1850 = vpop.permute.xlu0 %1849
        %1851 = vrot.lane.b32.xlu0 %v951, 104
        %v1852 = vpop.permute.xlu0 %1851
        %v1853 = vsel %vm1062, %v1848, 0
        %v1855 = vsel %vm1062, %v1850, 0
        %v1857 = vsel %vm1062, %v1852, 0
        %1859 = vmatprep.subr.mxu0 0.0
        %1860 = vmatpush1.xpose.msra.mxu0 %v1855
        %1861 = vmatprep.subr.mxu0 0.0
        %1862 = vmatpush1.xpose.msra.mxu0 %v1857
        %1863 = vmatprep.subr.mxu0 0.0
        %1864 = vmatpush1.xpose.msra.mxu0 0.0
        %1865 = vmatprep.subr.mxu0 0.0
        %1866 = vmatpush1.xpose.msra.mxu0 0.0
        %1867 = vmatprep.subr.mxu0 0.0
        %1868 = vmatpush1.xpose.msra.mxu0 0.0
        %1869 = vmatprep.subr.mxu0 0.0
        %1870 = vmatpush1.xpose.msra.mxu0 0.0
        %1871 = vmatprep.subr.mxu0 0.0
        %1872 = vmatpush1.xpose.msra.mxu0 0.0
        %1873 = vmatprep.subr.mxu0 0.0
        %1874 = vmatpush1.xpose.msra.mxu0 0.0
        %1875 = vmatprep.subr.mxu0 0.0
        %1876 = vmatpush1.xpose.msra.mxu0 0.0
        %1877 = vmatprep.subr.mxu0 0.0
        %1878 = vmatpush1.xpose.msra.mxu0 0.0
        %1879 = vmatprep.subr.mxu0 0.0
        %1880 = vmatpush1.xpose.msra.mxu0 0.0
        %1881 = vmatprep.subr.mxu0 0.0
        %1882 = vmatpush1.xpose.msra.mxu0 0.0
        %1883 = vmatprep.subr.mxu0 0.0
        %1884 = vmatpush1.xpose.msra.mxu0 0.0
        %1885 = vmatprep.subr.mxu0 0.0
        %1886 = vmatpush1.xpose.msra.mxu0 0.0
        %1887 = vmatprep.subr.mxu0 0.0
        %1888 = vmatpush1.xpose.msra.mxu0 0.0
        %1889 = vmatprep.subr.mxu0 0.0
        %1890 = vmatpush1.xpose.msra.mxu0 0.0
        %1891 = vmatprep.subr.mxu0 0.0
        %1892 = vmatpush1.xpose.msra.mxu0 0.0
        %1893 = vmatprep.subr.mxu0 0.0
        %1894 = vmatpush1.xpose.msra.mxu0 0.0
        %1895 = vmatprep.subr.mxu0 0.0
        %1896 = vmatpush1.xpose.msra.mxu0 0.0
        %1897 = vmatprep.subr.mxu0 0.0
        %1898 = vmatpush1.xpose.msra.mxu0 0.0
        %1899 = vmatprep.subr.mxu0 0.0
        %1900 = vmatpush1.xpose.msra.mxu0 0.0
        %1901 = vmatprep.subr.mxu0 0.0
        %1902 = vmatpush1.xpose.msra.mxu0 0.0
        %1903 = vmatprep.subr.mxu0 0.0
        %1904 = vmatpush1.xpose.msra.mxu0 0.0
        %1905 = vmatprep.subr.mxu0 0.0
        %1906 = vmatpush1.xpose.msra.mxu0 0.0
        %1907 = vmatprep.subr.mxu0 0.0
        %1908 = vmatpush1.xpose.msra.mxu0 0.0
        %1909 = vmatprep.subr.mxu0 0.0
        %1910 = vmatpush1.xpose.msra.mxu0 0.0
        %1911 = vmatprep.subr.mxu0 0.0
        %1912 = vmatpush1.xpose.msra.mxu0 0.0
        %1913 = vmatprep.subr.mxu0 0.0
        %1914 = vmatpush1.xpose.msra.mxu0 0.0
        %1915 = vmatprep.subr.mxu0 0.0
        %1916 = vmatpush1.xpose.msra.mxu0 0.0
        %1917 = vmatprep.subr.mxu0 0.0
        %1918 = vmatpush1.xpose.msra.mxu0 0.0
        %1919 = vmatprep.subr.mxu0 0.0
        %1920 = vmatpush1.xpose.msra.mxu0 0.0
        %1921 = vmatprep.subr.mxu0 0.0
        %1922 = vmatpush1.xpose.msra.mxu0 0.0
        %1923 = vmatprep.mubr.f32.mxu0 0.0
        %1924 = vmatmul.mubr.f32.gmra.mrb[0].mxu0 %v1853
        %v1925 = vpop.f32.mrb[0].mxu0
        %v1926 = vadd.f32 0.0, %v1925
        %v1927 = vpop.f32.mrb[0].mxu0
        %1928 = vdwg.mxu0
        %v1929 = vsel %vm1142, %v1926, -inf
        %1930 = vmax.xlane.f32.xlu0 %v1929
        %v1931 = vpop.xlane.xlu0 %1930
        %v1932 = vsub.f32 %v1926, %v1931
        %v1933 = vmul.f32 %v1932, 1.442695
        %v1934 = vpow.pop %v1933
        %v1935 = vsel %vm1142, %v1934, 0.0
        %1936 = vadd.xlane.f32.xlu0 %v1935
        %v1937 = vpop.xlane.xlu0 %1936
        %v1938 = vrcp.pop %v1937
        %v1939 = vmul.f32 %v752, %v1938
        %v1940 = vmul.f32 %v1934, %v1939
        %s1941 = scalar_lea.vmem %s739, 24 [#allocation23]
        %1942 = vst.msk [vmem:[%s1941] sm:$0xff] %vm1142, %v1940
        %v1943 = vadd.f32 %v1677, %v1940
        %1944 = vrot.lane.b32.xlu0 %v1050, 104
        %v1945 = vpop.permute.xlu0 %1944
        %1946 = vrot.lane.b32.xlu0 %v1055, 104
        %v1947 = vpop.permute.xlu0 %1946
        %v1951 = vsel %vm1142, %v1940, 0
        %1953 = vmatprep.subr.mxu0 0.0
        %1954 = vmatpush1.msra.mxu0 %v1945
        %1955 = vmatprep.subr.mxu0 0.0
        %1956 = vmatpush1.msra.mxu0 %v1947
        %1957 = vmatprep.subr.mxu0 0.0
        %1958 = vmatpush1.msra.mxu0 0.0
        %1959 = vmatprep.subr.mxu0 0.0
        %1960 = vmatpush1.msra.mxu0 0.0
        %1961 = vmatprep.subr.mxu0 0.0
        %1962 = vmatpush1.msra.mxu0 0.0
        %1963 = vmatprep.subr.mxu0 0.0
        %1964 = vmatpush1.msra.mxu0 0.0
        %1965 = vmatprep.subr.mxu0 0.0
        %1966 = vmatpush1.msra.mxu0 0.0
        %1967 = vmatprep.subr.mxu0 0.0
        %1968 = vmatpush1.msra.mxu0 0.0
        %1969 = vmatprep.subr.mxu0 0.0
        %1970 = vmatpush1.msra.mxu0 0.0
        %1971 = vmatprep.subr.mxu0 0.0
        %1972 = vmatpush1.msra.mxu0 0.0
        %1973 = vmatprep.subr.mxu0 0.0
        %1974 = vmatpush1.msra.mxu0 0.0
        %1975 = vmatprep.subr.mxu0 0.0
        %1976 = vmatpush1.msra.mxu0 0.0
        %1977 = vmatprep.subr.mxu0 0.0
        %1978 = vmatpush1.msra.mxu0 0.0
        %1979 = vmatprep.subr.mxu0 0.0
        %1980 = vmatpush1.msra.mxu0 0.0
        %1981 = vmatprep.subr.mxu0 0.0
        %1982 = vmatpush1.msra.mxu0 0.0
        %1983 = vmatprep.subr.mxu0 0.0
        %1984 = vmatpush1.msra.mxu0 0.0
        %1985 = vmatprep.subr.mxu0 0.0
        %1986 = vmatpush1.msra.mxu0 0.0
        %1987 = vmatprep.subr.mxu0 0.0
        %1988 = vmatpush1.msra.mxu0 0.0
        %1989 = vmatprep.subr.mxu0 0.0
        %1990 = vmatpush1.msra.mxu0 0.0
        %1991 = vmatprep.subr.mxu0 0.0
        %1992 = vmatpush1.msra.mxu0 0.0
        %1993 = vmatprep.subr.mxu0 0.0
        %1994 = vmatpush1.msra.mxu0 0.0
        %1995 = vmatprep.subr.mxu0 0.0
        %1996 = vmatpush1.msra.mxu0 0.0
        %1997 = vmatprep.subr.mxu0 0.0
        %1998 = vmatpush1.msra.mxu0 0.0
        %1999 = vmatprep.subr.mxu0 0.0
        %2000 = vmatpush1.msra.mxu0 0.0
        %2001 = vmatprep.subr.mxu0 0.0
        %2002 = vmatpush1.msra.mxu0 0.0
        %2003 = vmatprep.subr.mxu0 0.0
        %2004 = vmatpush1.msra.mxu0 0.0
        %2005 = vmatprep.subr.mxu0 0.0
        %2006 = vmatpush1.msra.mxu0 0.0
        %2007 = vmatprep.subr.mxu0 0.0
        %2008 = vmatpush1.msra.mxu0 0.0
        %2009 = vmatprep.subr.mxu0 0.0
        %2010 = vmatpush1.msra.mxu0 0.0
        %2011 = vmatprep.subr.mxu0 0.0
        %2012 = vmatpush1.msra.mxu0 0.0
        %2013 = vmatprep.subr.mxu0 0.0
        %2014 = vmatpush1.msra.mxu0 0.0
        %2015 = vmatprep.subr.mxu0 0.0
        %2016 = vmatpush1.msra.mxu0 0.0
        %2017 = vmatprep.mubr.f32.mxu0 0.0
        %2018 = vmatmul.mubr.f32.gmra.mrb[0].mxu0 %v1951
        %v2019 = vpop.f32.mrb[0].mxu0
        %v2020 = vadd.f32 0.0, %v2019
        %v2021 = vpop.f32.mrb[0].mxu0
        %2022 = vdwg.mxu0
        %2023 = vrot.lane.b32.xlu0 %v1058, 104
        %v2024 = vpop.permute.xlu0 %2023
        %2025 = vrot.lane.b32.xlu0 %v1059, 104
        %v2026 = vpop.permute.xlu0 %2025
        %2027 = vrot.lane.b32.xlu0 %v1060, 104
        %v2028 = vpop.permute.xlu0 %2027
        %2029 = vrot.lane.b32.xlu0 %v1061, 104
        %v2030 = vpop.permute.xlu0 %2029
        %v2032 = vsel %vm1062, %v2020, 0
        %v2034 = vsel %vm1062, %v2024, 0
        %v2036 = vsel %vm1062, %v2026, 0
        %v2038 = vsel %vm1062, %v2028, 0
        %v2040 = vsel %vm1062, %v2030, 0
        %2042 = vmatprep.subr.mxu0 0.0
        %2043 = vmatpush1.xpose.msra.mxu0 %v2034
        %2044 = vmatprep.subr.mxu0 0.0
        %2045 = vmatpush1.xpose.msra.mxu0 %v2036
        %2046 = vmatprep.subr.mxu0 0.0
        %2047 = vmatpush1.xpose.msra.mxu0 %v2038
        %2048 = vmatprep.subr.mxu0 0.0
        %2049 = vmatpush1.xpose.msra.mxu0 %v2040
        %2050 = vmatprep.subr.mxu0 0.0
        %2051 = vmatpush1.xpose.msra.mxu0 0.0
        %2052 = vmatprep.subr.mxu0 0.0
        %2053 = vmatpush1.xpose.msra.mxu0 0.0
        %2054 = vmatprep.subr.mxu0 0.0
        %2055 = vmatpush1.xpose.msra.mxu0 0.0
        %2056 = vmatprep.subr.mxu0 0.0
        %2057 = vmatpush1.xpose.msra.mxu0 0.0
        %2058 = vmatprep.subr.mxu0 0.0
        %2059 = vmatpush1.xpose.msra.mxu0 0.0
        %2060 = vmatprep.subr.mxu0 0.0
        %2061 = vmatpush1.xpose.msra.mxu0 0.0
        %2062 = vmatprep.subr.mxu0 0.0
        %2063 = vmatpush1.xpose.msra.mxu0 0.0
        %2064 = vmatprep.subr.mxu0 0.0
        %2065 = vmatpush1.xpose.msra.mxu0 0.0
        %2066 = vmatprep.subr.mxu0 0.0
        %2067 = vmatpush1.xpose.msra.mxu0 0.0
        %2068 = vmatprep.subr.mxu0 0.0
        %2069 = vmatpush1.xpose.msra.mxu0 0.0
        %2070 = vmatprep.subr.mxu0 0.0
        %2071 = vmatpush1.xpose.msra.mxu0 0.0
        %2072 = vmatprep.subr.mxu0 0.0
        %2073 = vmatpush1.xpose.msra.mxu0 0.0
        %2074 = vmatprep.subr.mxu0 0.0
        %2075 = vmatpush1.xpose.msra.mxu0 0.0
        %2076 = vmatprep.subr.mxu0 0.0
        %2077 = vmatpush1.xpose.msra.mxu0 0.0
        %2078 = vmatprep.subr.mxu0 0.0
        %2079 = vmatpush1.xpose.msra.mxu0 0.0
        %2080 = vmatprep.subr.mxu0 0.0
        %2081 = vmatpush1.xpose.msra.mxu0 0.0
        %2082 = vmatprep.subr.mxu0 0.0
        %2083 = vmatpush1.xpose.msra.mxu0 0.0
        %2084 = vmatprep.subr.mxu0 0.0
        %2085 = vmatpush1.xpose.msra.mxu0 0.0
        %2086 = vmatprep.subr.mxu0 0.0
        %2087 = vmatpush1.xpose.msra.mxu0 0.0
        %2088 = vmatprep.subr.mxu0 0.0
        %2089 = vmatpush1.xpose.msra.mxu0 0.0
        %2090 = vmatprep.subr.mxu0 0.0
        %2091 = vmatpush1.xpose.msra.mxu0 0.0
        %2092 = vmatprep.subr.mxu0 0.0
        %2093 = vmatpush1.xpose.msra.mxu0 0.0
        %2094 = vmatprep.subr.mxu0 0.0
        %2095 = vmatpush1.xpose.msra.mxu0 0.0
        %2096 = vmatprep.subr.mxu0 0.0
        %2097 = vmatpush1.xpose.msra.mxu0 0.0
        %2098 = vmatprep.subr.mxu0 0.0
        %2099 = vmatpush1.xpose.msra.mxu0 0.0
        %2100 = vmatprep.subr.mxu0 0.0
        %2101 = vmatpush1.xpose.msra.mxu0 0.0
        %2102 = vmatprep.subr.mxu0 0.0
        %2103 = vmatpush1.xpose.msra.mxu0 0.0
        %2104 = vmatprep.subr.mxu0 0.0
        %2105 = vmatpush1.xpose.msra.mxu0 0.0
        %2106 = vmatprep.mubr.f32.mxu0 0.0
        %2107 = vmatmul.mubr.f32.gmra.mrb[0].mxu0 %v2032
        %v2108 = vpop.f32.mrb[0].mxu0
        %v2109 = vadd.f32 0.0, %v2108
        %v2110 = vpop.f32.mrb[0].mxu0
        %2111 = vdwg.mxu0
        %v2112 = vadd.f32 %v1846, %v2109
        %v2113 = vmul.f32 %v1943, 0.25
        %2114 = vst.msk [vmem:[%s746] sm:$0xff] %vm1142, %v2113
        %v2115 = vld [vmem:[#allocation20] sm:$0x1]
        %v2117 = vlaneseq
        %v2118 = vshrl.u32 %v2117, 7
        %v2119 = vsub.s32 0, %v2118
        %v2120 = vrot.slane %v2115, %v2119
        %v2122 = vadd.f32 %v2112, %v2120
        %2123 = vst.msk [vmem:[%s732] sm:$0xff] %vm764, %v2122
        %s2124 = sand.u32 %s343, 1
        %s2125 = scalar_lea.sflag [#allocation4], %s2124
        %s2126 = sand.u32 %s343, 1
        %s2127 = smul.addr %s2126, 8
        %s2128 = scalar_lea.vmem [#allocation22], %s2127
        %s2129 = sand.u32 %s45, 1
        %s2130 = scalar_lea.sflag [#allocation24], %s2129
        %s2131 = sand.u32 %s371, 1
        %s2132 = smul.addr %s2131, 32
        %s2133 = scalar_lea.vmem [#allocation23], %s2132
        %s2134 = sand.u32 %s45, 1
        %s2135 = scalar_lea.sflag [#allocation24], %s2134
        %s2136 = sand.u32 %s399, 1
        %s2137 = smul.addr %s2136, 8
        %s2138 = scalar_lea.vmem [#allocation25], %s2137
        // Predicated region
        $region117: #{tpu_custom_call.1} parent=67 // pred_check
          %p2139 = pneg %p353
        $region118: #{tpu_custom_call.1} parent=67 // pred_check_branch
          %2141 = sbr.rel (%p2139) target = $region120
        $region119: #{tpu_custom_call.1} parent=67 // pred_region
          %s2143 = ssub.s32 128, 128
          %2144 = vsyncadd %s2125, %s2143
          %s2145 = sadd.s32 %s50, %s49
          %s2146 = smul.addr %s2145, 128
          %s2147 = scalar_lea.hbm %s12, %s2146
          %s2149 = sshll.u32 %s2128, 4
          %s2150 = int_to_ptr.vmem [resolvable:$true] %s2149
          %2152 = dma.vmem_to_hbm [thread:$0]  %s2150, 128, %s2147, %s2125
        $region120: #{tpu_custom_call.1} parent=67 // pred_fallthru
          _
        // Predicated region
        $region121: #{tpu_custom_call.1} parent=67 // pred_check
          %p2153 = pneg %p381
        $region122: #{tpu_custom_call.1} parent=67 // pred_check_branch
          %2155 = sbr.rel (%p2153) target = $region124
        $region123: #{tpu_custom_call.1} parent=67 // pred_region
          %s2157 = ssub.s32 512, 512
          %2158 = vsyncadd %s2130, %s2157
          %s2159 = smul.addr %s49, 4
          %s2160 = sadd.s32 %s50, %s2159
          %s2161 = smul.addr %s2160, 128
          %s2162 = scalar_lea.hbm %s13, %s2161
          %s2163 = sshll.u32 %s2133, 4
          %s2164 = int_to_ptr.vmem [resolvable:$true] %s2163
          %2169 = dma.vmem_to_hbm [thread:$0]  %s2164, 512, %s2162, %s2130, 128, 128, 8
        $region124: #{tpu_custom_call.1} parent=67 // pred_fallthru
          _
        // Predicated region
        $region125: #{tpu_custom_call.1} parent=67 // pred_check
          %p2170 = pneg %p409
        $region126: #{tpu_custom_call.1} parent=67 // pred_check_branch
          %2172 = sbr.rel (%p2170) target = $region128
        $region127: #{tpu_custom_call.1} parent=67 // pred_region
          %s2174 = ssub.s32 128, 128
          %2175 = vsyncadd %s2135, %s2174
          %s2176 = sadd.s32 %s50, %s49
          %s2177 = smul.addr %s2176, 128
          %s2178 = scalar_lea.hbm %s14, %s2177
          %s2180 = sshll.u32 %s2138, 4
          %s2181 = int_to_ptr.vmem [resolvable:$true] %s2180
          %2183 = dma.vmem_to_hbm [thread:$0]  %s2181, 128, %s2178, %s2135
        $region128: #{tpu_custom_call.1} parent=67 // pred_fallthru
          _
      $region68: #{tpu_custom_call.1} parent=5 // pred_fallthru
        _
      %p2184 = scmp.le.s32.totalorder 2, %s40
      // Predicated region
      $region129: #{tpu_custom_call.1} parent=5 // pred_check
        %p2185 = pneg %p2184
      $region130: #{tpu_custom_call.1} parent=5 // pred_check_branch
        %2187 = sbr.rel (%p2185) target = $region132
      $region131: #{tpu_custom_call.1} parent=5 // pred_region
        %s2188 = ssub.s32 %s40, 2
        // Predicated region
        $region133: #{tpu_custom_call.1} parent=131 // pred_check
          %p2189 = pneg %p359
        $region134: #{tpu_custom_call.1} parent=131 // pred_check_branch
          %2191 = sbr.rel (%p2189) target = $region136
        $region135: #{tpu_custom_call.1} parent=131 // pred_region
          %s2192 = sand.u32 %s344, 1
          %s2193 = scalar_lea.sflag [#allocation4], %s2192
          %s2194 = sand.u32 %s344, 1
          %s2195 = smul.addr %s2194, 8
          %s2196 = scalar_lea.vmem [#allocation22], %s2195
          %2197 = dma.done %s2193, 128
        $region136: #{tpu_custom_call.1} parent=131 // pred_fallthru
          _
        // Predicated region
        $region137: #{tpu_custom_call.1} parent=131 // pred_check
          %p2198 = pneg %p387
        $region138: #{tpu_custom_call.1} parent=131 // pred_check_branch
          %2200 = sbr.rel (%p2198) target = $region140
        $region139: #{tpu_custom_call.1} parent=131 // pred_region
          %s2201 = sand.u32 %s46, 1
          %s2202 = scalar_lea.sflag [#allocation24], %s2201
          %s2203 = sand.u32 %s372, 1
          %s2204 = smul.addr %s2203, 32
          %s2205 = scalar_lea.vmem [#allocation23], %s2204
          %2206 = dma.done %s2202, 512
        $region140: #{tpu_custom_call.1} parent=131 // pred_fallthru
          _
        // Predicated region
        $region141: #{tpu_custom_call.1} parent=131 // pred_check
          %p2207 = pneg %p415
        $region142: #{tpu_custom_call.1} parent=131 // pred_check_branch
          %2209 = sbr.rel (%p2207) target = $region144
        $region143: #{tpu_custom_call.1} parent=131 // pred_region
          %s2210 = sand.u32 %s46, 1
          %s2211 = scalar_lea.sflag [#allocation24], %s2210
          %s2212 = sand.u32 %s400, 1
          %s2213 = smul.addr %s2212, 8
          %s2214 = scalar_lea.vmem [#allocation25], %s2213
          %2215 = dma.done %s2211, 128
        $region144: #{tpu_custom_call.1} parent=131 // pred_fallthru
          _
      $region132: #{tpu_custom_call.1} parent=5 // pred_fallthru
        _
    $region6: #{tpu_custom_call.1} parent=1 // loop_footer
      %s44 = sadd.s32 1, %s40
    $region7: #{tpu_custom_call.1} parent=1 // loop_footer_branch
      %39 = sbr.rel target = $region3
    $region8: #{tpu_custom_call.1} parent=1 // loop_exit
      _
    %2216 = vsyncpa [#allocation3], 1
    %s2217 = scalar_lea.sflag [#allocation3], 1
    %2218 = vsyncpa %s2217, 1
    %2219 = vsyncpa [#allocation6], 1
    %s2220 = scalar_lea.sflag [#allocation6], 1
    %2221 = vsyncpa %s2220, 1
    %2222 = vsyncpa [#allocation9], 1
    %s2223 = scalar_lea.sflag [#allocation9], 1
    %2224 = vsyncpa %s2223, 1
    %2225 = vsyncpa [#allocation12], 1
    %2226 = vsyncpa [#allocation15], 1
    %2227 = vsyncpa [#allocation18], 1
    %2228 = vsyncpa [#allocation21], 1
    %2229 = vsyncpa [#allocation4], 1
    %s2230 = scalar_lea.sflag [#allocation4], 1
    %2231 = vsyncpa %s2230, 1
    %2232 = vsyncpa [#allocation24], 1
    %s2233 = scalar_lea.sflag [#allocation24], 1
    %2234 = vsyncpa %s2233, 1

</llo_original>
